<compile_context>
chip_gen: v5e
topology: v5e:2x2
jax: 0.10.0
libtpu: 0.0.40
codegen_flags: <defaults>
</compile_context>

<pallas_src>
import functools

import jax
import jax.numpy as jnp
from jax import lax
from jax.experimental import pallas as pl
from jax.experimental.pallas import tpu as pltpu

_BN_EPS = 1e-5
_NUM_PHASES = 4
_KSIZE = 5
_PAD = 2


def _gelu(x):
    # exact (erf-based) GELU matching torch.nn.GELU() default; erf via the
    # Abramowitz & Stegun 7.1.26 polynomial (~1.5e-7 abs err); reciprocal on the EUP.
    a1, a2, a3, a4, a5 = 0.254829592, -0.284496736, 1.421413741, -1.453152027, 1.061405429
    pc = 0.3275911
    u = x * 0.7071067811865476
    au = jnp.abs(u)
    t = pl.reciprocal(1.0 + pc * au, approx=True)
    poly = t * (a1 + t * (a2 + t * (a3 + t * (a4 + t * a5))))
    erf_au = 1.0 - poly * jnp.exp(-au * au)
    erf_u = jnp.where(u >= 0.0, erf_au, -erf_au)
    return 0.5 * x * (1.0 + erf_u)


def _residual_unit_kernel(x_ref, w1_ref, wd_ref, w2_ref, pos_ref,
                          g1_ref, b1_ref, g2_ref, b2_ref, g3_ref, b3_ref,
                          o_ref,
                          s1_ref, q1_ref, s2_ref, q2_ref, s3_ref, q3_ref,
                          *, length, inv_count, use_shortcut):
    phase = pl.program_id(0)
    tile = pl.program_id(1)
    last = _NUM_PHASES - 1

    # ---------------- per-phase bookkeeping (first tile of each phase) ----------------
    @pl.when(jnp.logical_and(phase == 0, tile == 0))
    def _():
        for r in (s1_ref, q1_ref, s2_ref, q2_ref, s3_ref, q3_ref):
            r[...] = jnp.zeros_like(r)

    def _finalize(s_ref, q_ref, g_ref, b_ref):
        # (sum, sumsq) -> (scale, shift):  BN(v) = v * scale + shift
        mean = s_ref[...] * inv_count
        var = jnp.maximum(q_ref[...] * inv_count - mean * mean, 0.0)
        scale = g_ref[...] * lax.rsqrt(var + _BN_EPS)
        s_ref[...] = scale
        q_ref[...] = b_ref[...] - mean * scale

    @pl.when(jnp.logical_and(phase == 1, tile == 0))
    def _():
        _finalize(s1_ref, q1_ref, g1_ref, b1_ref)

    @pl.when(jnp.logical_and(phase == 2, tile == 0))
    def _():
        _finalize(s2_ref, q2_ref, g2_ref, b2_ref)

    @pl.when(jnp.logical_and(phase == last, tile == 0))
    def _():
        _finalize(s3_ref, q3_ref, g3_ref, b3_ref)

    # ---------------- pointwise1 (1x1 conv) on the MXU: (C,C) @ (C, lanes) -------------
    x = x_ref[...]
    y1 = jnp.dot(w1_ref[...], x, preferred_element_type=jnp.float32)

    @pl.when(phase == 0)
    def _():
        s1_ref[...] += jnp.sum(y1, axis=1, keepdims=True)
        q1_ref[...] += jnp.sum(y1 * y1, axis=1, keepdims=True)

    # ---------------- phases >= 1: BN1 + GELU + depthwise ------------------------------
    @pl.when(phase >= 1)
    def _():
        y2 = _gelu(y1 * s1_ref[...] + q1_ref[...])

        # depthwise conv (k=5, pad=2) with batch folded into lanes: register-resident
        # shifted reads + per-sample boundary masks (pos = lane index modulo L).
        pos = pos_ref[...]                               # (1, lanes) int32
        y3 = wd_ref[:, _PAD:_PAD + 1] * y2               # center tap (d = 0)
        for k in range(_KSIZE):
            d = k - _PAD
            if d == 0:
                continue
            shifted = jnp.roll(y2, shift=-d, axis=1)     # shifted[:, j] = y2[:, j + d]
            valid = (pos >= -d) if d < 0 else (pos < length - d)
            y3 = y3 + wd_ref[:, k:k + 1] * jnp.where(valid, shifted, 0.0)

        @pl.when(phase == 1)
        def _():
            s2_ref[...] += jnp.sum(y3, axis=1, keepdims=True)
            q2_ref[...] += jnp.sum(y3 * y3, axis=1, keepdims=True)

        # ------------- phases >= 2: BN2 + GELU + pointwise2 ----------------------------
        @pl.when(phase >= 2)
        def _():
            y4 = _gelu(y3 * s2_ref[...] + q2_ref[...])
            y5 = jnp.dot(w2_ref[...], y4, preferred_element_type=jnp.float32)

            @pl.when(phase == 2)
            def _():
                s3_ref[...] += jnp.sum(y5, axis=1, keepdims=True)
                q3_ref[...] += jnp.sum(y5 * y5, axis=1, keepdims=True)

            # --------- final phase: BN3 + shortcut + GELU, write the output block ------
            @pl.when(phase == last)
            def _():
                z = y5 * s3_ref[...] + q3_ref[...]
                if use_shortcut:
                    z = z + x
                o_ref[...] = _gelu(z).astype(o_ref.dtype)


def _pick_batch_tile(n, length, max_lanes=4096):
    """Largest divisor of n whose folded lane width is 128-aligned (lane-dense blocks);
    fall back to a single full-array tile, which is always a legal block shape."""
    best = None
    for bt in range(1, n + 1):
        if n % bt == 0 and bt * length <= max_lanes and (bt * length) % 128 == 0:
            best = bt
    return best if best is not None else n


def custom_residual_unit(x_ncl, params):
    """x_ncl: (N, Cin, L) float32 in PyTorch Conv1d (NCL) layout.  Returns (N, Cout, L)."""
    n, cin, length = x_ncl.shape
    cout = params["w2"].shape[0]
    use_shortcut = (cin == cout)

    bt = _pick_batch_tile(n, length)
    lanes = bt * length
    n_tiles = n // bt

    # channel-major slab with batch folded into lanes: (N, C, L) -> (C, N*L)
    x_cm = jnp.transpose(x_ncl.astype(jnp.float32), (1, 0, 2)).reshape(cin, n * length)
    # within-sample position of every lane (periodic with L; identical for every tile)
    pos = (jnp.arange(lanes, dtype=jnp.int32) % length).reshape(1, lanes)

    col = lambda v: v.reshape(-1, 1).astype(jnp.float32)
    args = (
        x_cm,
        params["w1"].astype(jnp.float32),     # (Cin, Cin)   (out, in)
        params["wd"].astype(jnp.float32),     # (Cin, 5)     (channel, tap)
        params["w2"].astype(jnp.float32),     # (Cout, Cin)  (out, in)
        pos,
        col(params["g1"]), col(params["b1"]),
        col(params["g2"]), col(params["b2"]),
        col(params["g3"]), col(params["b3"]),
    )

    def const_spec(shape):
        return pl.BlockSpec(shape, lambda p, t: (0, 0))

    kernel = functools.partial(
        _residual_unit_kernel,
        length=length,
        inv_count=1.0 / float(n * length),
        use_shortcut=use_shortcut,
    )

    grid_spec = pltpu.PrefetchScalarGridSpec(
        num_scalar_prefetch=0,
        grid=(_NUM_PHASES, n_tiles),                                 # (phase, batch tile)
        in_specs=[
            pl.BlockSpec((cin, lanes), lambda p, t: (0, t)),         # x (folded lanes)
            const_spec((cin, cin)),
            const_spec((cin, _KSIZE)),
            const_spec((cout, cin)),
            const_spec((1, lanes)),                                  # per-lane position
            const_spec((cin, 1)), const_spec((cin, 1)),
            const_spec((cin, 1)), const_spec((cin, 1)),
            const_spec((cout, 1)), const_spec((cout, 1)),
        ],
        # phases 0-2 pin the (untouched) output block to block 0, so no garbage is
        # written back to HBM; only phase 3 streams real output blocks out.
        out_specs=pl.BlockSpec(
            (cout, lanes),
            lambda p, t: (0, jnp.where(p == _NUM_PHASES - 1, t, 0))),
        scratch_shapes=[
            pltpu.VMEM((cin, 1), jnp.float32), pltpu.VMEM((cin, 1), jnp.float32),    # BN1
            pltpu.VMEM((cin, 1), jnp.float32), pltpu.VMEM((cin, 1), jnp.float32),    # BN2
            pltpu.VMEM((cout, 1), jnp.float32), pltpu.VMEM((cout, 1), jnp.float32),  # BN3
        ],
    )

    out_cm = pl.pallas_call(
        kernel,
        grid_spec=grid_spec,
        out_shape=jax.ShapeDtypeStruct((cout, n * length), jnp.float32),
        compiler_params=pltpu.CompilerParams(
            # both axes carry cross-tile BN-statistics state -> must remain sequential
            dimension_semantics=("arbitrary", "arbitrary"),
            vmem_limit_bytes=32 * 1024 * 1024,
        ),
    )(*args)

    return jnp.transpose(out_cm.reshape(cout, n, length), (1, 0, 2))


# --------------------------- pure-JAX reference (sanity check) ---------------------------

def _reference(x, params, use_shortcut):
    def bn(v, g, b):
        m = jnp.mean(v, axis=(0, 2), keepdims=True)
        var = jnp.mean((v - m) ** 2, axis=(0, 2), keepdims=True)
        return (v - m) * lax.rsqrt(var + _BN_EPS) * g.reshape(1, -1, 1) + b.reshape(1, -1, 1)

    act = lambda v: jax.nn.gelu(v, approximate=False)
    length = x.shape[-1]
    y = jnp.einsum("oi,nil->nol", params["w1"], x)
    y = act(bn(y, params["g1"], params["b1"]))
    ypad = jnp.pad(y, ((0, 0), (0, 0), (_PAD, _PAD)))
    y = sum(params["wd"][:, k].reshape(1, -1, 1) * ypad[:, :, k:k + length]
            for k in range(_KSIZE))
    y = act(bn(y, params["g2"], params["b2"]))
    y = jnp.einsum("oi,nil->nol", params["w2"], y)
    y = bn(y, params["g3"], params["b3"])
    if use_shortcut:
        y = y + x
    return act(y)


# ------------------------------------------ main ------------------------------------------

if __name__ == "__main__":
    N, Cin, Cout, L = 2, 8, 8, 16   # input_filters == output_filters -> shortcut path used

    key = jax.random.PRNGKey(0)
    ks = jax.random.split(key, 10)

    params = {
        "w1": 0.3 * jax.random.normal(ks[0], (Cin, Cin), jnp.float32),   # pointwise1 (out,in)
        "wd": 0.3 * jax.random.normal(ks[1], (Cin, 5), jnp.float32),     # depthwise  (ch,tap)
        "w2": 0.3 * jax.random.normal(ks[2], (Cout, Cin), jnp.float32),  # pointwise2 (out,in)
        "g1": 1.0 + 0.1 * jax.random.normal(ks[3], (Cin,), jnp.float32),
        "b1": 0.1 * jax.random.normal(ks[4], (Cin,), jnp.float32),
        "g2": 1.0 + 0.1 * jax.random.normal(ks[5], (Cin,), jnp.float32),
        "b2": 0.1 * jax.random.normal(ks[6], (Cin,), jnp.float32),
        "g3": 1.0 + 0.1 * jax.random.normal(ks[7], (Cout,), jnp.float32),
        "b3": 0.1 * jax.random.normal(ks[8], (Cout,), jnp.float32),
    }
    x = jax.random.normal(ks[9], (N, Cin, L), jnp.float32)

    y = custom_residual_unit(x, params)
    jax.block_until_ready(y)

    assert y.shape == (N, Cout, L) and y.dtype == jnp.float32
    y_ref = _reference(x, params, use_shortcut=(Cin == Cout))
    err = float(jnp.max(jnp.abs(y - y_ref)))
    assert err < 2e-2, f"max abs err vs reference: {err}"
    print("KERNEL_OK")
</pallas_src>

<mosaic_0001>
module attributes {stable_mosaic.version = 11 : i64} {
  func.func @_residual_unit_kernel(%arg0: i32, %arg1: i32, %arg2: memref<8x32xf32, #tpu.memory_space<vmem>>, %arg3: memref<8x8xf32, #tpu.memory_space<vmem>>, %arg4: memref<8x5xf32, #tpu.memory_space<vmem>>, %arg5: memref<8x8xf32, #tpu.memory_space<vmem>>, %arg6: memref<1x32xi32, #tpu.memory_space<vmem>>, %arg7: memref<8x1xf32, #tpu.memory_space<vmem>>, %arg8: memref<8x1xf32, #tpu.memory_space<vmem>>, %arg9: memref<8x1xf32, #tpu.memory_space<vmem>>, %arg10: memref<8x1xf32, #tpu.memory_space<vmem>>, %arg11: memref<8x1xf32, #tpu.memory_space<vmem>>, %arg12: memref<8x1xf32, #tpu.memory_space<vmem>>, %arg13: memref<8x32xf32, #tpu.memory_space<vmem>>, %arg14: memref<8x1xf32, #tpu.memory_space<vmem>>, %arg15: memref<8x1xf32, #tpu.memory_space<vmem>>, %arg16: memref<8x1xf32, #tpu.memory_space<vmem>>, %arg17: memref<8x1xf32, #tpu.memory_space<vmem>>, %arg18: memref<8x1xf32, #tpu.memory_space<vmem>>, %arg19: memref<8x1xf32, #tpu.memory_space<vmem>>) attributes {dimension_semantics = [#tpu.dimension_semantics<arbitrary>, #tpu.dimension_semantics<arbitrary>], iteration_bounds = array<i64: 4, 1>, scalar_prefetch = 0 : i64, scratch_operands = 6 : i64, tpu.core_type = #tpu.core_type<tc>, window_params = [{transform_indices = @transform_0, window_bounds = array<i64: 8, 32>}, {pipeline_mode = #tpu.pipeline_mode<synchronous>, transform_indices = @transform_1, window_bounds = array<i64: 8, 8>}, {pipeline_mode = #tpu.pipeline_mode<synchronous>, transform_indices = @transform_2, window_bounds = array<i64: 8, 5>}, {pipeline_mode = #tpu.pipeline_mode<synchronous>, transform_indices = @transform_3, window_bounds = array<i64: 8, 8>}, {pipeline_mode = #tpu.pipeline_mode<synchronous>, transform_indices = @transform_4, window_bounds = array<i64: 1, 32>}, {pipeline_mode = #tpu.pipeline_mode<synchronous>, transform_indices = @transform_5, window_bounds = array<i64: 8, 1>}, {pipeline_mode = #tpu.pipeline_mode<synchronous>, transform_indices = @transform_6, window_bounds = array<i64: 8, 1>}, {pipeline_mode = #tpu.pipeline_mode<synchronous>, transform_indices = @transform_7, window_bounds = array<i64: 8, 1>}, {pipeline_mode = #tpu.pipeline_mode<synchronous>, transform_indices = @transform_8, window_bounds = array<i64: 8, 1>}, {pipeline_mode = #tpu.pipeline_mode<synchronous>, transform_indices = @transform_9, window_bounds = array<i64: 8, 1>}, {pipeline_mode = #tpu.pipeline_mode<synchronous>, transform_indices = @transform_10, window_bounds = array<i64: 8, 1>}, {transform_indices = @transform_11, window_bounds = array<i64: 8, 32>}]} {
    %c0_i32 = arith.constant 0 : i32
    %0 = arith.cmpi eq, %arg0, %c0_i32 : i32
    %c0_i32_0 = arith.constant 0 : i32
    %1 = arith.cmpi eq, %arg1, %c0_i32_0 : i32
    %2 = arith.andi %0, %1 : i1
    %3 = arith.extui %2 : i1 to i32
    %c0_i32_1 = arith.constant 0 : i32
    %4 = arith.cmpi ne, %3, %c0_i32_1 : i32
    scf.if %4 {
      %cst_15 = arith.constant 0.000000e+00 : f32
      %29 = vector.broadcast %cst_15 : f32 to vector<8x1xf32>
      %c0_16 = arith.constant 0 : index
      %c0_17 = arith.constant 0 : index
      %30 = vector.load %arg14[%c0_16, %c0_17] : memref<8x1xf32, #tpu.memory_space<vmem>>, vector<8x1xf32>
      tpu.vector_store %arg14[%c0_16, %c0_17], %29 {strides = array<i32>} : memref<8x1xf32, #tpu.memory_space<vmem>>, vector<8x1xf32>,
      %cst_18 = arith.constant 0.000000e+00 : f32
      %31 = vector.broadcast %cst_18 : f32 to vector<8x1xf32>
      %c0_19 = arith.constant 0 : index
      %c0_20 = arith.constant 0 : index
      %32 = vector.load %arg15[%c0_19, %c0_20] : memref<8x1xf32, #tpu.memory_space<vmem>>, vector<8x1xf32>
      tpu.vector_store %arg15[%c0_19, %c0_20], %31 {strides = array<i32>} : memref<8x1xf32, #tpu.memory_space<vmem>>, vector<8x1xf32>,
      %cst_21 = arith.constant 0.000000e+00 : f32
      %33 = vector.broadcast %cst_21 : f32 to vector<8x1xf32>
      %c0_22 = arith.constant 0 : index
      %c0_23 = arith.constant 0 : index
      %34 = vector.load %arg16[%c0_22, %c0_23] : memref<8x1xf32, #tpu.memory_space<vmem>>, vector<8x1xf32>
      tpu.vector_store %arg16[%c0_22, %c0_23], %33 {strides = array<i32>} : memref<8x1xf32, #tpu.memory_space<vmem>>, vector<8x1xf32>,
      %cst_24 = arith.constant 0.000000e+00 : f32
      %35 = vector.broadcast %cst_24 : f32 to vector<8x1xf32>
      %c0_25 = arith.constant 0 : index
      %c0_26 = arith.constant 0 : index
      %36 = vector.load %arg17[%c0_25, %c0_26] : memref<8x1xf32, #tpu.memory_space<vmem>>, vector<8x1xf32>
      tpu.vector_store %arg17[%c0_25, %c0_26], %35 {strides = array<i32>} : memref<8x1xf32, #tpu.memory_space<vmem>>, vector<8x1xf32>,
      %cst_27 = arith.constant 0.000000e+00 : f32
      %37 = vector.broadcast %cst_27 : f32 to vector<8x1xf32>
      %c0_28 = arith.constant 0 : index
      %c0_29 = arith.constant 0 : index
      %38 = vector.load %arg18[%c0_28, %c0_29] : memref<8x1xf32, #tpu.memory_space<vmem>>, vector<8x1xf32>
      tpu.vector_store %arg18[%c0_28, %c0_29], %37 {strides = array<i32>} : memref<8x1xf32, #tpu.memory_space<vmem>>, vector<8x1xf32>,
      %cst_30 = arith.constant 0.000000e+00 : f32
      %39 = vector.broadcast %cst_30 : f32 to vector<8x1xf32>
      %c0_31 = arith.constant 0 : index
      %c0_32 = arith.constant 0 : index
      %40 = vector.load %arg19[%c0_31, %c0_32] : memref<8x1xf32, #tpu.memory_space<vmem>>, vector<8x1xf32>
      tpu.vector_store %arg19[%c0_31, %c0_32], %39 {strides = array<i32>} : memref<8x1xf32, #tpu.memory_space<vmem>>, vector<8x1xf32>,
    } else {
    }
    %c1_i32 = arith.constant 1 : i32
    %5 = arith.cmpi eq, %arg0, %c1_i32 : i32
    %c0_i32_2 = arith.constant 0 : i32
    %6 = arith.cmpi eq, %arg1, %c0_i32_2 : i32
    %7 = arith.andi %5, %6 : i1
    %8 = arith.extui %7 : i1 to i32
    %c0_i32_3 = arith.constant 0 : i32
    %9 = arith.cmpi ne, %8, %c0_i32_3 : i32
    scf.if %9 {
      %c0_15 = arith.constant 0 : index
      %c0_16 = arith.constant 0 : index
      %29 = vector.load %arg14[%c0_15, %c0_16] : memref<8x1xf32, #tpu.memory_space<vmem>>, vector<8x1xf32>
      %cst_17 = arith.constant 3.125000e-02 : f32
      %30 = vector.broadcast %cst_17 : f32 to vector<8x1xf32>
      %31 = arith.mulf %29, %30 : vector<8x1xf32>
      %c0_18 = arith.constant 0 : index
      %c0_19 = arith.constant 0 : index
      %32 = vector.load %arg15[%c0_18, %c0_19] : memref<8x1xf32, #tpu.memory_space<vmem>>, vector<8x1xf32>
      %cst_20 = arith.constant 3.125000e-02 : f32
      %33 = vector.broadcast %cst_20 : f32 to vector<8x1xf32>
      %34 = arith.mulf %32, %33 : vector<8x1xf32>
      %35 = arith.mulf %31, %31 : vector<8x1xf32>
      %36 = arith.subf %34, %35 : vector<8x1xf32>
      %cst_21 = arith.constant 0.000000e+00 : f32
      %37 = vector.broadcast %cst_21 : f32 to vector<8x1xf32>
      %38 = arith.maximumf %36, %37 : vector<8x1xf32>
      %c0_22 = arith.constant 0 : index
      %c0_23 = arith.constant 0 : index
      %39 = vector.load %arg7[%c0_22, %c0_23] : memref<8x1xf32, #tpu.memory_space<vmem>>, vector<8x1xf32>
      %cst_24 = arith.constant 9.99999974E-6 : f32
      %40 = vector.broadcast %cst_24 : f32 to vector<8x1xf32>
      %41 = arith.addf %38, %40 : vector<8x1xf32>
      %42 = math.rsqrt %41 : vector<8x1xf32>
      %43 = arith.mulf %39, %42 : vector<8x1xf32>
      %c0_25 = arith.constant 0 : index
      %c0_26 = arith.constant 0 : index
      %44 = vector.load %arg14[%c0_25, %c0_26] : memref<8x1xf32, #tpu.memory_space<vmem>>, vector<8x1xf32>
      tpu.vector_store %arg14[%c0_25, %c0_26], %43 {strides = array<i32>} : memref<8x1xf32, #tpu.memory_space<vmem>>, vector<8x1xf32>,
      %c0_27 = arith.constant 0 : index
      %c0_28 = arith.constant 0 : index
      %45 = vector.load %arg8[%c0_27, %c0_28] : memref<8x1xf32, #tpu.memory_space<vmem>>, vector<8x1xf32>
      %46 = arith.mulf %31, %43 : vector<8x1xf32>
      %47 = arith.subf %45, %46 : vector<8x1xf32>
      %c0_29 = arith.constant 0 : index
      %c0_30 = arith.constant 0 : index
      %48 = vector.load %arg15[%c0_29, %c0_30] : memref<8x1xf32, #tpu.memory_space<vmem>>, vector<8x1xf32>
      tpu.vector_store %arg15[%c0_29, %c0_30], %47 {strides = array<i32>} : memref<8x1xf32, #tpu.memory_space<vmem>>, vector<8x1xf32>,
    } else {
    }
    %c2_i32 = arith.constant 2 : i32
    %10 = arith.cmpi eq, %arg0, %c2_i32 : i32
    %c0_i32_4 = arith.constant 0 : i32
    %11 = arith.cmpi eq, %arg1, %c0_i32_4 : i32
    %12 = arith.andi %10, %11 : i1
    %13 = arith.extui %12 : i1 to i32
    %c0_i32_5 = arith.constant 0 : i32
    %14 = arith.cmpi ne, %13, %c0_i32_5 : i32
    scf.if %14 {
      %c0_15 = arith.constant 0 : index
      %c0_16 = arith.constant 0 : index
      %29 = vector.load %arg16[%c0_15, %c0_16] : memref<8x1xf32, #tpu.memory_space<vmem>>, vector<8x1xf32>
      %cst_17 = arith.constant 3.125000e-02 : f32
      %30 = vector.broadcast %cst_17 : f32 to vector<8x1xf32>
      %31 = arith.mulf %29, %30 : vector<8x1xf32>
      %c0_18 = arith.constant 0 : index
      %c0_19 = arith.constant 0 : index
      %32 = vector.load %arg17[%c0_18, %c0_19] : memref<8x1xf32, #tpu.memory_space<vmem>>, vector<8x1xf32>
      %cst_20 = arith.constant 3.125000e-02 : f32
      %33 = vector.broadcast %cst_20 : f32 to vector<8x1xf32>
      %34 = arith.mulf %32, %33 : vector<8x1xf32>
      %35 = arith.mulf %31, %31 : vector<8x1xf32>
      %36 = arith.subf %34, %35 : vector<8x1xf32>
      %cst_21 = arith.constant 0.000000e+00 : f32
      %37 = vector.broadcast %cst_21 : f32 to vector<8x1xf32>
      %38 = arith.maximumf %36, %37 : vector<8x1xf32>
      %c0_22 = arith.constant 0 : index
      %c0_23 = arith.constant 0 : index
      %39 = vector.load %arg9[%c0_22, %c0_23] : memref<8x1xf32, #tpu.memory_space<vmem>>, vector<8x1xf32>
      %cst_24 = arith.constant 9.99999974E-6 : f32
      %40 = vector.broadcast %cst_24 : f32 to vector<8x1xf32>
      %41 = arith.addf %38, %40 : vector<8x1xf32>
      %42 = math.rsqrt %41 : vector<8x1xf32>
      %43 = arith.mulf %39, %42 : vector<8x1xf32>
      %c0_25 = arith.constant 0 : index
      %c0_26 = arith.constant 0 : index
      %44 = vector.load %arg16[%c0_25, %c0_26] : memref<8x1xf32, #tpu.memory_space<vmem>>, vector<8x1xf32>
      tpu.vector_store %arg16[%c0_25, %c0_26], %43 {strides = array<i32>} : memref<8x1xf32, #tpu.memory_space<vmem>>, vector<8x1xf32>,
      %c0_27 = arith.constant 0 : index
      %c0_28 = arith.constant 0 : index
      %45 = vector.load %arg10[%c0_27, %c0_28] : memref<8x1xf32, #tpu.memory_space<vmem>>, vector<8x1xf32>
      %46 = arith.mulf %31, %43 : vector<8x1xf32>
      %47 = arith.subf %45, %46 : vector<8x1xf32>
      %c0_29 = arith.constant 0 : index
      %c0_30 = arith.constant 0 : index
      %48 = vector.load %arg17[%c0_29, %c0_30] : memref<8x1xf32, #tpu.memory_space<vmem>>, vector<8x1xf32>
      tpu.vector_store %arg17[%c0_29, %c0_30], %47 {strides = array<i32>} : memref<8x1xf32, #tpu.memory_space<vmem>>, vector<8x1xf32>,
    } else {
    }
    %c3_i32 = arith.constant 3 : i32
    %15 = arith.cmpi eq, %arg0, %c3_i32 : i32
    %c0_i32_6 = arith.constant 0 : i32
    %16 = arith.cmpi eq, %arg1, %c0_i32_6 : i32
    %17 = arith.andi %15, %16 : i1
    %18 = arith.extui %17 : i1 to i32
    %c0_i32_7 = arith.constant 0 : i32
    %19 = arith.cmpi ne, %18, %c0_i32_7 : i32
    scf.if %19 {
      %c0_15 = arith.constant 0 : index
      %c0_16 = arith.constant 0 : index
      %29 = vector.load %arg18[%c0_15, %c0_16] : memref<8x1xf32, #tpu.memory_space<vmem>>, vector<8x1xf32>
      %cst_17 = arith.constant 3.125000e-02 : f32
      %30 = vector.broadcast %cst_17 : f32 to vector<8x1xf32>
      %31 = arith.mulf %29, %30 : vector<8x1xf32>
      %c0_18 = arith.constant 0 : index
      %c0_19 = arith.constant 0 : index
      %32 = vector.load %arg19[%c0_18, %c0_19] : memref<8x1xf32, #tpu.memory_space<vmem>>, vector<8x1xf32>
      %cst_20 = arith.constant 3.125000e-02 : f32
      %33 = vector.broadcast %cst_20 : f32 to vector<8x1xf32>
      %34 = arith.mulf %32, %33 : vector<8x1xf32>
      %35 = arith.mulf %31, %31 : vector<8x1xf32>
      %36 = arith.subf %34, %35 : vector<8x1xf32>
      %cst_21 = arith.constant 0.000000e+00 : f32
      %37 = vector.broadcast %cst_21 : f32 to vector<8x1xf32>
      %38 = arith.maximumf %36, %37 : vector<8x1xf32>
      %c0_22 = arith.constant 0 : index
      %c0_23 = arith.constant 0 : index
      %39 = vector.load %arg11[%c0_22, %c0_23] : memref<8x1xf32, #tpu.memory_space<vmem>>, vector<8x1xf32>
      %cst_24 = arith.constant 9.99999974E-6 : f32
      %40 = vector.broadcast %cst_24 : f32 to vector<8x1xf32>
      %41 = arith.addf %38, %40 : vector<8x1xf32>
      %42 = math.rsqrt %41 : vector<8x1xf32>
      %43 = arith.mulf %39, %42 : vector<8x1xf32>
      %c0_25 = arith.constant 0 : index
      %c0_26 = arith.constant 0 : index
      %44 = vector.load %arg18[%c0_25, %c0_26] : memref<8x1xf32, #tpu.memory_space<vmem>>, vector<8x1xf32>
      tpu.vector_store %arg18[%c0_25, %c0_26], %43 {strides = array<i32>} : memref<8x1xf32, #tpu.memory_space<vmem>>, vector<8x1xf32>,
      %c0_27 = arith.constant 0 : index
      %c0_28 = arith.constant 0 : index
      %45 = vector.load %arg12[%c0_27, %c0_28] : memref<8x1xf32, #tpu.memory_space<vmem>>, vector<8x1xf32>
      %46 = arith.mulf %31, %43 : vector<8x1xf32>
      %47 = arith.subf %45, %46 : vector<8x1xf32>
      %c0_29 = arith.constant 0 : index
      %c0_30 = arith.constant 0 : index
      %48 = vector.load %arg19[%c0_29, %c0_30] : memref<8x1xf32, #tpu.memory_space<vmem>>, vector<8x1xf32>
      tpu.vector_store %arg19[%c0_29, %c0_30], %47 {strides = array<i32>} : memref<8x1xf32, #tpu.memory_space<vmem>>, vector<8x1xf32>,
    } else {
    }
    %c0 = arith.constant 0 : index
    %c0_8 = arith.constant 0 : index
    %20 = vector.load %arg2[%c0, %c0_8] : memref<8x32xf32, #tpu.memory_space<vmem>>, vector<8x32xf32>
    %c0_9 = arith.constant 0 : index
    %c0_10 = arith.constant 0 : index
    %21 = vector.load %arg3[%c0_9, %c0_10] : memref<8x8xf32, #tpu.memory_space<vmem>>, vector<8x8xf32>
    %cst = arith.constant dense<0.000000e+00> : vector<8x32xf32>
    %22 = tpu.matmul %21, %20, %cst {dimension_numbers = #tpu.dot_dimension_numbers<[1], [0], [0], [1], [0, 0, 1, 1], [], []>} : vector<8x8xf32>, vector<8x32xf32>, vector<8x32xf32> -> vector<8x32xf32>
    %c0_i32_11 = arith.constant 0 : i32
    %23 = arith.cmpi eq, %arg0, %c0_i32_11 : i32
    %24 = arith.extui %23 : i1 to i32
    %c0_i32_12 = arith.constant 0 : i32
    %25 = arith.cmpi ne, %24, %c0_i32_12 : i32
    scf.if %25 {
      %c0_15 = arith.constant 0 : index
      %c0_16 = arith.constant 0 : index
      %29 = vector.load %arg14[%c0_15, %c0_16] : memref<8x1xf32, #tpu.memory_space<vmem>>, vector<8x1xf32>
      %cst_17 = arith.constant dense<0.000000e+00> : vector<8xf32>
      %30 = vector.multi_reduction <add>, %22, %cst_17 [1] : vector<8x32xf32> to vector<8xf32>
      %31 = vector.shape_cast %30 : vector<8xf32> to vector<8x1xf32>
      %32 = arith.addf %29, %31 : vector<8x1xf32>
      %c0_18 = arith.constant 0 : index
      %c0_19 = arith.constant 0 : index
      %33 = vector.load %arg14[%c0_18, %c0_19] : memref<8x1xf32, #tpu.memory_space<vmem>>, vector<8x1xf32>
      tpu.vector_store %arg14[%c0_18, %c0_19], %32 {strides = array<i32>} : memref<8x1xf32, #tpu.memory_space<vmem>>, vector<8x1xf32>,
      %c0_20 = arith.constant 0 : index
      %c0_21 = arith.constant 0 : index
      %34 = vector.load %arg15[%c0_20, %c0_21] : memref<8x1xf32, #tpu.memory_space<vmem>>, vector<8x1xf32>
      %35 = arith.mulf %22, %22 : vector<8x32xf32>
      %cst_22 = arith.constant dense<0.000000e+00> : vector<8xf32>
      %36 = vector.multi_reduction <add>, %35, %cst_22 [1] : vector<8x32xf32> to vector<8xf32>
      %37 = vector.shape_cast %36 : vector<8xf32> to vector<8x1xf32>
      %38 = arith.addf %34, %37 : vector<8x1xf32>
      %c0_23 = arith.constant 0 : index
      %c0_24 = arith.constant 0 : index
      %39 = vector.load %arg15[%c0_23, %c0_24] : memref<8x1xf32, #tpu.memory_space<vmem>>, vector<8x1xf32>
      tpu.vector_store %arg15[%c0_23, %c0_24], %38 {strides = array<i32>} : memref<8x1xf32, #tpu.memory_space<vmem>>, vector<8x1xf32>,
    } else {
    }
    %c1_i32_13 = arith.constant 1 : i32
    %26 = arith.cmpi sge, %arg0, %c1_i32_13 : i32
    %27 = arith.extui %26 : i1 to i32
    %c0_i32_14 = arith.constant 0 : i32
    %28 = arith.cmpi ne, %27, %c0_i32_14 : i32
    scf.if %28 {
      %c0_15 = arith.constant 0 : index
      %c0_16 = arith.constant 0 : index
      %29 = vector.load %arg14[%c0_15, %c0_16] : memref<8x1xf32, #tpu.memory_space<vmem>>, vector<8x1xf32>
      %30 = vector.broadcast %29 : vector<8x1xf32> to vector<8x32xf32>
      %31 = arith.mulf %22, %30 : vector<8x32xf32>
      %c0_17 = arith.constant 0 : index
      %c0_18 = arith.constant 0 : index
      %32 = vector.load %arg15[%c0_17, %c0_18] : memref<8x1xf32, #tpu.memory_space<vmem>>, vector<8x1xf32>
      %33 = vector.broadcast %32 : vector<8x1xf32> to vector<8x32xf32>
      %34 = arith.addf %31, %33 : vector<8x32xf32>
      %cst_19 = arith.constant 0.707106769 : f32
      %35 = vector.broadcast %cst_19 : f32 to vector<8x32xf32>
      %36 = arith.mulf %34, %35 : vector<8x32xf32>
      %37 = math.absf %36 : vector<8x32xf32>
      %cst_20 = arith.constant 0.327591091 : f32
      %38 = vector.broadcast %cst_20 : f32 to vector<8x32xf32>
      %39 = arith.mulf %38, %37 : vector<8x32xf32>
      %cst_21 = arith.constant 1.000000e+00 : f32
      %40 = vector.broadcast %cst_21 : f32 to vector<8x32xf32>
      %41 = arith.addf %40, %39 : vector<8x32xf32>
      %42 = tpu.reciprocal %41 {approx = true} : vector<8x32xf32> -> vector<8x32xf32>
      %cst_22 = arith.constant 1.06140542 : f32
      %43 = vector.broadcast %cst_22 : f32 to vector<8x32xf32>
      %44 = arith.mulf %42, %43 : vector<8x32xf32>
      %cst_23 = arith.constant -1.45315206 : f32
      %45 = vector.broadcast %cst_23 : f32 to vector<8x32xf32>
      %46 = arith.addf %45, %44 : vector<8x32xf32>
      %47 = arith.mulf %42, %46 : vector<8x32xf32>
      %cst_24 = arith.constant 1.42141378 : f32
      %48 = vector.broadcast %cst_24 : f32 to vector<8x32xf32>
      %49 = arith.addf %48, %47 : vector<8x32xf32>
      %50 = arith.mulf %42, %49 : vector<8x32xf32>
      %cst_25 = arith.constant -0.284496725 : f32
      %51 = vector.broadcast %cst_25 : f32 to vector<8x32xf32>
      %52 = arith.addf %51, %50 : vector<8x32xf32>
      %53 = arith.mulf %42, %52 : vector<8x32xf32>
      %cst_26 = arith.constant 0.254829586 : f32
      %54 = vector.broadcast %cst_26 : f32 to vector<8x32xf32>
      %55 = arith.addf %54, %53 : vector<8x32xf32>
      %56 = arith.mulf %42, %55 : vector<8x32xf32>
      %cst_27 = arith.constant 0.000000e+00 : f32
      %57 = vector.broadcast %cst_27 : f32 to vector<8x32xf32>
      %58 = arith.subf %57, %37 : vector<8x32xf32>
      %59 = arith.mulf %58, %37 : vector<8x32xf32>
      %60 = math.exp %59 : vector<8x32xf32>
      %61 = arith.mulf %56, %60 : vector<8x32xf32>
      %cst_28 = arith.constant 1.000000e+00 : f32
      %62 = vector.broadcast %cst_28 : f32 to vector<8x32xf32>
      %63 = arith.subf %62, %61 : vector<8x32xf32>
      %cst_29 = arith.constant 0.000000e+00 : f32
      %64 = vector.broadcast %cst_29 : f32 to vector<8x32xf32>
      %65 = arith.cmpf oge, %36, %64 : vector<8x32xf32>
      %cst_30 = arith.constant 0.000000e+00 : f32
      %66 = vector.broadcast %cst_30 : f32 to vector<8x32xf32>
      %67 = arith.subf %66, %63 : vector<8x32xf32>
      %68 = arith.select %65, %63, %67 : vector<8x32xi1>, vector<8x32xf32>
      %cst_31 = arith.constant 5.000000e-01 : f32
      %69 = vector.broadcast %cst_31 : f32 to vector<8x32xf32>
      %70 = arith.mulf %69, %34 : vector<8x32xf32>
      %cst_32 = arith.constant 1.000000e+00 : f32
      %71 = vector.broadcast %cst_32 : f32 to vector<8x32xf32>
      %72 = arith.addf %71, %68 : vector<8x32xf32>
      %73 = arith.mulf %70, %72 : vector<8x32xf32>
      %c0_33 = arith.constant 0 : index
      %c0_34 = arith.constant 0 : index
      %74 = vector.load %arg6[%c0_33, %c0_34] : memref<1x32xi32, #tpu.memory_space<vmem>>, vector<1x32xi32>
      %c0_35 = arith.constant 0 : index
      %c2 = arith.constant 2 : index
      %75 = vector.load %arg4[%c0_35, %c2] : memref<8x5xf32, #tpu.memory_space<vmem>>, vector<8x1xf32>
      %76 = vector.broadcast %75 : vector<8x1xf32> to vector<8x32xf32>
      %77 = arith.mulf %76, %73 : vector<8x32xf32>
      %78 = vector.extract_strided_slice %73 {offsets = [0, 30], sizes = [8, 2], strides = [1, 1]} : vector<8x32xf32> to vector<8x2xf32>
      %79 = vector.extract_strided_slice %73 {offsets = [0, 0], sizes = [8, 30], strides = [1, 1]} : vector<8x32xf32> to vector<8x30xf32>
      %80 = tpu.concatenate %78, %79 in 1 : vector<8x2xf32>, vector<8x30xf32> -> vector<8x32xf32>
      %c2_i32_36 = arith.constant 2 : i32
      %81 = vector.broadcast %c2_i32_36 : i32 to vector<1x32xi32>
      %82 = arith.cmpi sge, %74, %81 : vector<1x32xi32>
      %c0_37 = arith.constant 0 : index
      %c0_38 = arith.constant 0 : index
      %83 = vector.load %arg4[%c0_37, %c0_38] : memref<8x5xf32, #tpu.memory_space<vmem>>, vector<8x1xf32>
      %cst_39 = arith.constant 0.000000e+00 : f32
      %84 = vector.shape_cast %82 : vector<1x32xi1> to vector<1x32xi1>
      %85 = vector.broadcast %84 : vector<1x32xi1> to vector<8x32xi1>
      %86 = vector.broadcast %cst_39 : f32 to vector<8x32xf32>
      %87 = arith.select %85, %80, %86 : vector<8x32xi1>, vector<8x32xf32>
      %88 = vector.broadcast %83 : vector<8x1xf32> to vector<8x32xf32>
      %89 = arith.mulf %88, %87 : vector<8x32xf32>
      %90 = arith.addf %77, %89 : vector<8x32xf32>
      %91 = vector.extract_strided_slice %73 {offsets = [0, 31], sizes = [8, 1], strides = [1, 1]} : vector<8x32xf32> to vector<8x1xf32>
      %92 = vector.extract_strided_slice %73 {offsets = [0, 0], sizes = [8, 31], strides = [1, 1]} : vector<8x32xf32> to vector<8x31xf32>
      %93 = tpu.concatenate %91, %92 in 1 : vector<8x1xf32>, vector<8x31xf32> -> vector<8x32xf32>
      %c1_i32_40 = arith.constant 1 : i32
      %94 = vector.broadcast %c1_i32_40 : i32 to vector<1x32xi32>
      %95 = arith.cmpi sge, %74, %94 : vector<1x32xi32>
      %c0_41 = arith.constant 0 : index
      %c1 = arith.constant 1 : index
      %96 = vector.load %arg4[%c0_41, %c1] : memref<8x5xf32, #tpu.memory_space<vmem>>, vector<8x1xf32>
      %cst_42 = arith.constant 0.000000e+00 : f32
      %97 = vector.shape_cast %95 : vector<1x32xi1> to vector<1x32xi1>
      %98 = vector.broadcast %97 : vector<1x32xi1> to vector<8x32xi1>
      %99 = vector.broadcast %cst_42 : f32 to vector<8x32xf32>
      %100 = arith.select %98, %93, %99 : vector<8x32xi1>, vector<8x32xf32>
      %101 = vector.broadcast %96 : vector<8x1xf32> to vector<8x32xf32>
      %102 = arith.mulf %101, %100 : vector<8x32xf32>
      %103 = arith.addf %90, %102 : vector<8x32xf32>
      %104 = vector.extract_strided_slice %73 {offsets = [0, 1], sizes = [8, 31], strides = [1, 1]} : vector<8x32xf32> to vector<8x31xf32>
      %105 = vector.extract_strided_slice %73 {offsets = [0, 0], sizes = [8, 1], strides = [1, 1]} : vector<8x32xf32> to vector<8x1xf32>
      %106 = tpu.concatenate %104, %105 in 1 : vector<8x31xf32>, vector<8x1xf32> -> vector<8x32xf32>
      %c15_i32 = arith.constant 15 : i32
      %107 = vector.broadcast %c15_i32 : i32 to vector<1x32xi32>
      %108 = arith.cmpi slt, %74, %107 : vector<1x32xi32>
      %c0_43 = arith.constant 0 : index
      %c3 = arith.constant 3 : index
      %109 = vector.load %arg4[%c0_43, %c3] : memref<8x5xf32, #tpu.memory_space<vmem>>, vector<8x1xf32>
      %cst_44 = arith.constant 0.000000e+00 : f32
      %110 = vector.shape_cast %108 : vector<1x32xi1> to vector<1x32xi1>
      %111 = vector.broadcast %110 : vector<1x32xi1> to vector<8x32xi1>
      %112 = vector.broadcast %cst_44 : f32 to vector<8x32xf32>
      %113 = arith.select %111, %106, %112 : vector<8x32xi1>, vector<8x32xf32>
      %114 = vector.broadcast %109 : vector<8x1xf32> to vector<8x32xf32>
      %115 = arith.mulf %114, %113 : vector<8x32xf32>
      %116 = arith.addf %103, %115 : vector<8x32xf32>
      %117 = vector.extract_strided_slice %73 {offsets = [0, 2], sizes = [8, 30], strides = [1, 1]} : vector<8x32xf32> to vector<8x30xf32>
      %118 = vector.extract_strided_slice %73 {offsets = [0, 0], sizes = [8, 2], strides = [1, 1]} : vector<8x32xf32> to vector<8x2xf32>
      %119 = tpu.concatenate %117, %118 in 1 : vector<8x30xf32>, vector<8x2xf32> -> vector<8x32xf32>
      %c14_i32 = arith.constant 14 : i32
      %120 = vector.broadcast %c14_i32 : i32 to vector<1x32xi32>
      %121 = arith.cmpi slt, %74, %120 : vector<1x32xi32>
      %c0_45 = arith.constant 0 : index
      %c4 = arith.constant 4 : index
      %122 = vector.load %arg4[%c0_45, %c4] : memref<8x5xf32, #tpu.memory_space<vmem>>, vector<8x1xf32>
      %cst_46 = arith.constant 0.000000e+00 : f32
      %123 = vector.shape_cast %121 : vector<1x32xi1> to vector<1x32xi1>
      %124 = vector.broadcast %123 : vector<1x32xi1> to vector<8x32xi1>
      %125 = vector.broadcast %cst_46 : f32 to vector<8x32xf32>
      %126 = arith.select %124, %119, %125 : vector<8x32xi1>, vector<8x32xf32>
      %127 = vector.broadcast %122 : vector<8x1xf32> to vector<8x32xf32>
      %128 = arith.mulf %127, %126 : vector<8x32xf32>
      %129 = arith.addf %116, %128 : vector<8x32xf32>
      %c1_i32_47 = arith.constant 1 : i32
      %130 = arith.cmpi eq, %arg0, %c1_i32_47 : i32
      %131 = arith.extui %130 : i1 to i32
      %c0_i32_48 = arith.constant 0 : i32
      %132 = arith.cmpi ne, %131, %c0_i32_48 : i32
      scf.if %132 {
        %c0_51 = arith.constant 0 : index
        %c0_52 = arith.constant 0 : index
        %136 = vector.load %arg16[%c0_51, %c0_52] : memref<8x1xf32, #tpu.memory_space<vmem>>, vector<8x1xf32>
        %cst_53 = arith.constant dense<0.000000e+00> : vector<8xf32>
        %137 = vector.multi_reduction <add>, %129, %cst_53 [1] : vector<8x32xf32> to vector<8xf32>
        %138 = vector.shape_cast %137 : vector<8xf32> to vector<8x1xf32>
        %139 = arith.addf %136, %138 : vector<8x1xf32>
        %c0_54 = arith.constant 0 : index
        %c0_55 = arith.constant 0 : index
        %140 = vector.load %arg16[%c0_54, %c0_55] : memref<8x1xf32, #tpu.memory_space<vmem>>, vector<8x1xf32>
        tpu.vector_store %arg16[%c0_54, %c0_55], %139 {strides = array<i32>} : memref<8x1xf32, #tpu.memory_space<vmem>>, vector<8x1xf32>,
        %c0_56 = arith.constant 0 : index
        %c0_57 = arith.constant 0 : index
        %141 = vector.load %arg17[%c0_56, %c0_57] : memref<8x1xf32, #tpu.memory_space<vmem>>, vector<8x1xf32>
        %142 = arith.mulf %129, %129 : vector<8x32xf32>
        %cst_58 = arith.constant dense<0.000000e+00> : vector<8xf32>
        %143 = vector.multi_reduction <add>, %142, %cst_58 [1] : vector<8x32xf32> to vector<8xf32>
        %144 = vector.shape_cast %143 : vector<8xf32> to vector<8x1xf32>
        %145 = arith.addf %141, %144 : vector<8x1xf32>
        %c0_59 = arith.constant 0 : index
        %c0_60 = arith.constant 0 : index
        %146 = vector.load %arg17[%c0_59, %c0_60] : memref<8x1xf32, #tpu.memory_space<vmem>>, vector<8x1xf32>
        tpu.vector_store %arg17[%c0_59, %c0_60], %145 {strides = array<i32>} : memref<8x1xf32, #tpu.memory_space<vmem>>, vector<8x1xf32>,
      } else {
      }
      %c2_i32_49 = arith.constant 2 : i32
      %133 = arith.cmpi sge, %arg0, %c2_i32_49 : i32
      %134 = arith.extui %133 : i1 to i32
      %c0_i32_50 = arith.constant 0 : i32
      %135 = arith.cmpi ne, %134, %c0_i32_50 : i32
      scf.if %135 {
        %c0_51 = arith.constant 0 : index
        %c0_52 = arith.constant 0 : index
        %136 = vector.load %arg16[%c0_51, %c0_52] : memref<8x1xf32, #tpu.memory_space<vmem>>, vector<8x1xf32>
        %137 = vector.broadcast %136 : vector<8x1xf32> to vector<8x32xf32>
        %138 = arith.mulf %129, %137 : vector<8x32xf32>
        %c0_53 = arith.constant 0 : index
        %c0_54 = arith.constant 0 : index
        %139 = vector.load %arg17[%c0_53, %c0_54] : memref<8x1xf32, #tpu.memory_space<vmem>>, vector<8x1xf32>
        %140 = vector.broadcast %139 : vector<8x1xf32> to vector<8x32xf32>
        %141 = arith.addf %138, %140 : vector<8x32xf32>
        %cst_55 = arith.constant 0.707106769 : f32
        %142 = vector.broadcast %cst_55 : f32 to vector<8x32xf32>
        %143 = arith.mulf %141, %142 : vector<8x32xf32>
        %144 = math.absf %143 : vector<8x32xf32>
        %cst_56 = arith.constant 0.327591091 : f32
        %145 = vector.broadcast %cst_56 : f32 to vector<8x32xf32>
        %146 = arith.mulf %145, %144 : vector<8x32xf32>
        %cst_57 = arith.constant 1.000000e+00 : f32
        %147 = vector.broadcast %cst_57 : f32 to vector<8x32xf32>
        %148 = arith.addf %147, %146 : vector<8x32xf32>
        %149 = tpu.reciprocal %148 {approx = true} : vector<8x32xf32> -> vector<8x32xf32>
        %cst_58 = arith.constant 1.06140542 : f32
        %150 = vector.broadcast %cst_58 : f32 to vector<8x32xf32>
        %151 = arith.mulf %149, %150 : vector<8x32xf32>
        %cst_59 = arith.constant -1.45315206 : f32
        %152 = vector.broadcast %cst_59 : f32 to vector<8x32xf32>
        %153 = arith.addf %152, %151 : vector<8x32xf32>
        %154 = arith.mulf %149, %153 : vector<8x32xf32>
        %cst_60 = arith.constant 1.42141378 : f32
        %155 = vector.broadcast %cst_60 : f32 to vector<8x32xf32>
        %156 = arith.addf %155, %154 : vector<8x32xf32>
        %157 = arith.mulf %149, %156 : vector<8x32xf32>
        %cst_61 = arith.constant -0.284496725 : f32
        %158 = vector.broadcast %cst_61 : f32 to vector<8x32xf32>
        %159 = arith.addf %158, %157 : vector<8x32xf32>
        %160 = arith.mulf %149, %159 : vector<8x32xf32>
        %cst_62 = arith.constant 0.254829586 : f32
        %161 = vector.broadcast %cst_62 : f32 to vector<8x32xf32>
        %162 = arith.addf %161, %160 : vector<8x32xf32>
        %163 = arith.mulf %149, %162 : vector<8x32xf32>
        %cst_63 = arith.constant 0.000000e+00 : f32
        %164 = vector.broadcast %cst_63 : f32 to vector<8x32xf32>
        %165 = arith.subf %164, %144 : vector<8x32xf32>
        %166 = arith.mulf %165, %144 : vector<8x32xf32>
        %167 = math.exp %166 : vector<8x32xf32>
        %168 = arith.mulf %163, %167 : vector<8x32xf32>
        %cst_64 = arith.constant 1.000000e+00 : f32
        %169 = vector.broadcast %cst_64 : f32 to vector<8x32xf32>
        %170 = arith.subf %169, %168 : vector<8x32xf32>
        %cst_65 = arith.constant 0.000000e+00 : f32
        %171 = vector.broadcast %cst_65 : f32 to vector<8x32xf32>
        %172 = arith.cmpf oge, %143, %171 : vector<8x32xf32>
        %cst_66 = arith.constant 0.000000e+00 : f32
        %173 = vector.broadcast %cst_66 : f32 to vector<8x32xf32>
        %174 = arith.subf %173, %170 : vector<8x32xf32>
        %175 = arith.select %172, %170, %174 : vector<8x32xi1>, vector<8x32xf32>
        %cst_67 = arith.constant 5.000000e-01 : f32
        %176 = vector.broadcast %cst_67 : f32 to vector<8x32xf32>
        %177 = arith.mulf %176, %141 : vector<8x32xf32>
        %cst_68 = arith.constant 1.000000e+00 : f32
        %178 = vector.broadcast %cst_68 : f32 to vector<8x32xf32>
        %179 = arith.addf %178, %175 : vector<8x32xf32>
        %180 = arith.mulf %177, %179 : vector<8x32xf32>
        %c0_69 = arith.constant 0 : index
        %c0_70 = arith.constant 0 : index
        %181 = vector.load %arg5[%c0_69, %c0_70] : memref<8x8xf32, #tpu.memory_space<vmem>>, vector<8x8xf32>
        %cst_71 = arith.constant dense<0.000000e+00> : vector<8x32xf32>
        %182 = tpu.matmul %181, %180, %cst_71 {dimension_numbers = #tpu.dot_dimension_numbers<[1], [0], [0], [1], [0, 0, 1, 1], [], []>} : vector<8x8xf32>, vector<8x32xf32>, vector<8x32xf32> -> vector<8x32xf32>
        %c2_i32_72 = arith.constant 2 : i32
        %183 = arith.cmpi eq, %arg0, %c2_i32_72 : i32
        %184 = arith.extui %183 : i1 to i32
        %c0_i32_73 = arith.constant 0 : i32
        %185 = arith.cmpi ne, %184, %c0_i32_73 : i32
        scf.if %185 {
          %c0_76 = arith.constant 0 : index
          %c0_77 = arith.constant 0 : index
          %189 = vector.load %arg18[%c0_76, %c0_77] : memref<8x1xf32, #tpu.memory_space<vmem>>, vector<8x1xf32>
          %cst_78 = arith.constant dense<0.000000e+00> : vector<8xf32>
          %190 = vector.multi_reduction <add>, %182, %cst_78 [1] : vector<8x32xf32> to vector<8xf32>
          %191 = vector.shape_cast %190 : vector<8xf32> to vector<8x1xf32>
          %192 = arith.addf %189, %191 : vector<8x1xf32>
          %c0_79 = arith.constant 0 : index
          %c0_80 = arith.constant 0 : index
          %193 = vector.load %arg18[%c0_79, %c0_80] : memref<8x1xf32, #tpu.memory_space<vmem>>, vector<8x1xf32>
          tpu.vector_store %arg18[%c0_79, %c0_80], %192 {strides = array<i32>} : memref<8x1xf32, #tpu.memory_space<vmem>>, vector<8x1xf32>,
          %c0_81 = arith.constant 0 : index
          %c0_82 = arith.constant 0 : index
          %194 = vector.load %arg19[%c0_81, %c0_82] : memref<8x1xf32, #tpu.memory_space<vmem>>, vector<8x1xf32>
          %195 = arith.mulf %182, %182 : vector<8x32xf32>
          %cst_83 = arith.constant dense<0.000000e+00> : vector<8xf32>
          %196 = vector.multi_reduction <add>, %195, %cst_83 [1] : vector<8x32xf32> to vector<8xf32>
          %197 = vector.shape_cast %196 : vector<8xf32> to vector<8x1xf32>
          %198 = arith.addf %194, %197 : vector<8x1xf32>
          %c0_84 = arith.constant 0 : index
          %c0_85 = arith.constant 0 : index
          %199 = vector.load %arg19[%c0_84, %c0_85] : memref<8x1xf32, #tpu.memory_space<vmem>>, vector<8x1xf32>
          tpu.vector_store %arg19[%c0_84, %c0_85], %198 {strides = array<i32>} : memref<8x1xf32, #tpu.memory_space<vmem>>, vector<8x1xf32>,
        } else {
        }
        %c3_i32_74 = arith.constant 3 : i32
        %186 = arith.cmpi eq, %arg0, %c3_i32_74 : i32
        %187 = arith.extui %186 : i1 to i32
        %c0_i32_75 = arith.constant 0 : i32
        %188 = arith.cmpi ne, %187, %c0_i32_75 : i32
        scf.if %188 {
          %c0_76 = arith.constant 0 : index
          %c0_77 = arith.constant 0 : index
          %189 = vector.load %arg18[%c0_76, %c0_77] : memref<8x1xf32, #tpu.memory_space<vmem>>, vector<8x1xf32>
          %190 = vector.broadcast %189 : vector<8x1xf32> to vector<8x32xf32>
          %191 = arith.mulf %182, %190 : vector<8x32xf32>
          %c0_78 = arith.constant 0 : index
          %c0_79 = arith.constant 0 : index
          %192 = vector.load %arg19[%c0_78, %c0_79] : memref<8x1xf32, #tpu.memory_space<vmem>>, vector<8x1xf32>
          %193 = vector.broadcast %192 : vector<8x1xf32> to vector<8x32xf32>
          %194 = arith.addf %191, %193 : vector<8x32xf32>
          %195 = arith.addf %194, %20 : vector<8x32xf32>
          %cst_80 = arith.constant 0.707106769 : f32
          %196 = vector.broadcast %cst_80 : f32 to vector<8x32xf32>
          %197 = arith.mulf %195, %196 : vector<8x32xf32>
          %198 = math.absf %197 : vector<8x32xf32>
          %cst_81 = arith.constant 0.327591091 : f32
          %199 = vector.broadcast %cst_81 : f32 to vector<8x32xf32>
          %200 = arith.mulf %199, %198 : vector<8x32xf32>
          %cst_82 = arith.constant 1.000000e+00 : f32
          %201 = vector.broadcast %cst_82 : f32 to vector<8x32xf32>
          %202 = arith.addf %201, %200 : vector<8x32xf32>
          %203 = tpu.reciprocal %202 {approx = true} : vector<8x32xf32> -> vector<8x32xf32>
          %cst_83 = arith.constant 1.06140542 : f32
          %204 = vector.broadcast %cst_83 : f32 to vector<8x32xf32>
          %205 = arith.mulf %203, %204 : vector<8x32xf32>
          %cst_84 = arith.constant -1.45315206 : f32
          %206 = vector.broadcast %cst_84 : f32 to vector<8x32xf32>
          %207 = arith.addf %206, %205 : vector<8x32xf32>
          %208 = arith.mulf %203, %207 : vector<8x32xf32>
          %cst_85 = arith.constant 1.42141378 : f32
          %209 = vector.broadcast %cst_85 : f32 to vector<8x32xf32>
          %210 = arith.addf %209, %208 : vector<8x32xf32>
          %211 = arith.mulf %203, %210 : vector<8x32xf32>
          %cst_86 = arith.constant -0.284496725 : f32
          %212 = vector.broadcast %cst_86 : f32 to vector<8x32xf32>
          %213 = arith.addf %212, %211 : vector<8x32xf32>
          %214 = arith.mulf %203, %213 : vector<8x32xf32>
          %cst_87 = arith.constant 0.254829586 : f32
          %215 = vector.broadcast %cst_87 : f32 to vector<8x32xf32>
          %216 = arith.addf %215, %214 : vector<8x32xf32>
          %217 = arith.mulf %203, %216 : vector<8x32xf32>
          %cst_88 = arith.constant 0.000000e+00 : f32
          %218 = vector.broadcast %cst_88 : f32 to vector<8x32xf32>
          %219 = arith.subf %218, %198 : vector<8x32xf32>
          %220 = arith.mulf %219, %198 : vector<8x32xf32>
          %221 = math.exp %220 : vector<8x32xf32>
          %222 = arith.mulf %217, %221 : vector<8x32xf32>
          %cst_89 = arith.constant 1.000000e+00 : f32
          %223 = vector.broadcast %cst_89 : f32 to vector<8x32xf32>
          %224 = arith.subf %223, %222 : vector<8x32xf32>
          %cst_90 = arith.constant 0.000000e+00 : f32
          %225 = vector.broadcast %cst_90 : f32 to vector<8x32xf32>
          %226 = arith.cmpf oge, %197, %225 : vector<8x32xf32>
          %cst_91 = arith.constant 0.000000e+00 : f32
          %227 = vector.broadcast %cst_91 : f32 to vector<8x32xf32>
          %228 = arith.subf %227, %224 : vector<8x32xf32>
          %229 = arith.select %226, %224, %228 : vector<8x32xi1>, vector<8x32xf32>
          %cst_92 = arith.constant 5.000000e-01 : f32
          %230 = vector.broadcast %cst_92 : f32 to vector<8x32xf32>
          %231 = arith.mulf %230, %195 : vector<8x32xf32>
          %cst_93 = arith.constant 1.000000e+00 : f32
          %232 = vector.broadcast %cst_93 : f32 to vector<8x32xf32>
          %233 = arith.addf %232, %229 : vector<8x32xf32>
          %234 = arith.mulf %231, %233 : vector<8x32xf32>
          %c0_94 = arith.constant 0 : index
          %c0_95 = arith.constant 0 : index
          %235 = vector.load %arg13[%c0_94, %c0_95] : memref<8x32xf32, #tpu.memory_space<vmem>>, vector<8x32xf32>
          tpu.vector_store %arg13[%c0_94, %c0_95], %234 {strides = array<i32>} : memref<8x32xf32, #tpu.memory_space<vmem>>, vector<8x32xf32>,
        } else {
        }
      } else {
      }
    } else {
    }
    return
  }
  func.func @transform_0(%arg0: i32, %arg1: i32) -> (i32, i32) {
    %c0_i32 = arith.constant 0 : i32
    %c0_i32_0 = arith.constant 0 : i32
    return %c0_i32, %arg1 : i32, i32
  }
  func.func @transform_1(%arg0: i32, %arg1: i32) -> (i32, i32) {
    %c0_i32 = arith.constant 0 : i32
    %c0_i32_0 = arith.constant 0 : i32
    %c0_i32_1 = arith.constant 0 : i32
    return %c0_i32, %c0_i32_0 : i32, i32
  }
  func.func @transform_2(%arg0: i32, %arg1: i32) -> (i32, i32) {
    %c0_i32 = arith.constant 0 : i32
    %c0_i32_0 = arith.constant 0 : i32
    %c0_i32_1 = arith.constant 0 : i32
    return %c0_i32, %c0_i32_0 : i32, i32
  }
  func.func @transform_3(%arg0: i32, %arg1: i32) -> (i32, i32) {
    %c0_i32 = arith.constant 0 : i32
    %c0_i32_0 = arith.constant 0 : i32
    %c0_i32_1 = arith.constant 0 : i32
    return %c0_i32, %c0_i32_0 : i32, i32
  }
  func.func @transform_4(%arg0: i32, %arg1: i32) -> (i32, i32) {
    %c0_i32 = arith.constant 0 : i32
    %c0_i32_0 = arith.constant 0 : i32
    %c0_i32_1 = arith.constant 0 : i32
    return %c0_i32, %c0_i32_0 : i32, i32
  }
  func.func @transform_5(%arg0: i32, %arg1: i32) -> (i32, i32) {
    %c0_i32 = arith.constant 0 : i32
    %c0_i32_0 = arith.constant 0 : i32
    %c0_i32_1 = arith.constant 0 : i32
    return %c0_i32, %c0_i32_0 : i32, i32
  }
  func.func @transform_6(%arg0: i32, %arg1: i32) -> (i32, i32) {
    %c0_i32 = arith.constant 0 : i32
    %c0_i32_0 = arith.constant 0 : i32
    %c0_i32_1 = arith.constant 0 : i32
    return %c0_i32, %c0_i32_0 : i32, i32
  }
  func.func @transform_7(%arg0: i32, %arg1: i32) -> (i32, i32) {
    %c0_i32 = arith.constant 0 : i32
    %c0_i32_0 = arith.constant 0 : i32
    %c0_i32_1 = arith.constant 0 : i32
    return %c0_i32, %c0_i32_0 : i32, i32
  }
  func.func @transform_8(%arg0: i32, %arg1: i32) -> (i32, i32) {
    %c0_i32 = arith.constant 0 : i32
    %c0_i32_0 = arith.constant 0 : i32
    %c0_i32_1 = arith.constant 0 : i32
    return %c0_i32, %c0_i32_0 : i32, i32
  }
  func.func @transform_9(%arg0: i32, %arg1: i32) -> (i32, i32) {
    %c0_i32 = arith.constant 0 : i32
    %c0_i32_0 = arith.constant 0 : i32
    %c0_i32_1 = arith.constant 0 : i32
    return %c0_i32, %c0_i32_0 : i32, i32
  }
  func.func @transform_10(%arg0: i32, %arg1: i32) -> (i32, i32) {
    %c0_i32 = arith.constant 0 : i32
    %c0_i32_0 = arith.constant 0 : i32
    %c0_i32_1 = arith.constant 0 : i32
    return %c0_i32, %c0_i32_0 : i32, i32
  }
  func.func @transform_11(%arg0: i32, %arg1: i32) -> (i32, i32) {
    %c3_i32 = arith.constant 3 : i32
    %0 = arith.cmpi eq, %arg0, %c3_i32 : i32
    %c0_i32 = arith.constant 0 : i32
    %1 = arith.select %0, %arg1, %c0_i32 : i32
    %c0_i32_0 = arith.constant 0 : i32
    %c0_i32_1 = arith.constant 0 : i32
    return %c0_i32_0, %1 : i32, i32
  }
}

</mosaic_0001>

<llo_original>
// kernel: tpu_custom_call.1
$region0: #{tpu_custom_call.1}
  #allocation0 [shape = 'u32[]', space=smem, size = 0x4, offset = 0x4, fixed_abs, tag = 'smem constant byte address 0x4 - core index']
  #allocation1 [shape = 'u32[72,128]{1,0:T(1,128)}', space=vmem, size = 0x9000, scoped, tag = 'internal scratch']
  #allocation2 [shape = 'f32[8,1]{1,0:T(8,128)}', space=vmem, size = 0x1000, scoped, tag = 'scratch operand']
  #allocation3 [shape = 'f32[8,1]{1,0:T(8,128)}', space=vmem, size = 0x1000, scoped, tag = 'scratch operand']
  #allocation4 [shape = 'f32[8,1]{1,0:T(8,128)}', space=vmem, size = 0x1000, scoped, tag = 'scratch operand']
  #allocation5 [shape = 'f32[8,1]{1,0:T(8,128)}', space=vmem, size = 0x1000, scoped, tag = 'scratch operand']
  #allocation6 [shape = 'f32[8,1]{1,0:T(8,128)}', space=vmem, size = 0x1000, scoped, tag = 'scratch operand']
  #allocation7 [shape = 'f32[8,1]{1,0:T(8,128)}', space=vmem, size = 0x1000, scoped, tag = 'scratch operand']
  %s0 = inlined_call_operand.vmem [shape: f32[8,32], index: 0, kind: input, shape index: {}]
  %s1 = inlined_call_operand.vmem [shape: f32[8,8], index: 1, kind: input, shape index: {}]
  %s2 = inlined_call_operand.vmem [shape: f32[8,5], index: 2, kind: input, shape index: {}]
  %s3 = inlined_call_operand.vmem [shape: f32[8,8], index: 3, kind: input, shape index: {}]
  %s4 = inlined_call_operand.vmem [shape: s32[1,32], index: 4, kind: input, shape index: {}]
  %s5 = inlined_call_operand.vmem [shape: f32[8,1], index: 5, kind: input, shape index: {}]
  %s6 = inlined_call_operand.vmem [shape: f32[8,1], index: 6, kind: input, shape index: {}]
  %s7 = inlined_call_operand.vmem [shape: f32[8,1], index: 7, kind: input, shape index: {}]
  %s8 = inlined_call_operand.vmem [shape: f32[8,1], index: 8, kind: input, shape index: {}]
  %s9 = inlined_call_operand.vmem [shape: f32[8,1], index: 9, kind: input, shape index: {}]
  %s10 = inlined_call_operand.vmem [shape: f32[8,1], index: 10, kind: input, shape index: {}]
  %s11 = inlined_call_operand.hbm [shape: f32[8,32], index: 11, kind: output, shape index: {}]
  %s12 = sld [smem:[#allocation0]]
  $region117: #{tpu_custom_call.1} parent=0
    _
  %s14 = ssub.s32 1, %s12
  %s15 = scalar_select 0, %s14, %s12
  $region1: #{tpu_custom_call.1} parent=0
    #allocation8 [shape = 'u8[8192]{0}', space=vmem, size = 0x2000, scoped, tag = 'output window, operand 0']
    #allocation9 [shape = 's32[2]{0}', space=sflag, size = 0x8, scoped, tag = 'scoped memory for tpu_custom_call.1']
    %16 = vsyncpa [#allocation9], 0
    %s17 = scalar_lea.sflag [#allocation9], 1
    %18 = vsyncpa %s17, 0
    loop: start=0, step=1, limit=6
    $region2: #{tpu_custom_call.1} parent=1 // loop_pre_header
      _
    $region3: #{tpu_custom_call.1} parent=1 // loop_header
      %s20 = sphi 0, %s24
      %p21 = scmp.ge.s32.totalorder %s20, 6
      %s27 = sphi 0, %s39
      %s28 = sphi 0, %s35
      %s29 = sphi 0, %s27
      %s30 = sphi 0, %s28
      %s31 = sphi 0, %s29
      %s32 = sphi 0, %s30
      %s42 = sphi 0, %s44
      %s45 = sphi 0, %s42
      %s46 = sphi 0, %s45
      %s62 = sphi 0, %s46
      %s66 = sphi 0, %s66
      %s68 = sphi 0, %s66
      %s69 = sphi 0, %s68
      %s83 = sphi 0, %s69
      %s87 = sphi 0, %s87
      %s89 = sphi 0, %s87
      %s90 = sphi 0, %s89
      %s104 = sphi 0, %s90
      %s108 = sphi 0, %s108
      %s110 = sphi 0, %s108
      %s111 = sphi 0, %s110
      %s125 = sphi 0, %s111
      %s129 = sphi 0, %s129
      %s131 = sphi 0, %s129
      %s132 = sphi 0, %s131
      %s146 = sphi 0, %s132
      %s150 = sphi 0, %s150
      %s152 = sphi 0, %s150
      %s153 = sphi 0, %s152
      %s167 = sphi 0, %s153
      %s171 = sphi 0, %s171
      %s173 = sphi 0, %s171
      %s174 = sphi 0, %s173
      %s188 = sphi 0, %s174
      %s192 = sphi 0, %s192
      %s194 = sphi 0, %s192
      %s195 = sphi 0, %s194
      %s209 = sphi 0, %s195
      %s213 = sphi 0, %s213
      %s215 = sphi 0, %s213
      %s216 = sphi 0, %s215
      %s230 = sphi 0, %s216
      %s234 = sphi 0, %s234
      %s236 = sphi 0, %s234
      %s237 = sphi 0, %s236
      %s251 = sphi 0, %s237
      %s255 = sphi 0, %s255
      %s257 = sphi 0, %s255
      %s258 = sphi 0, %s257
      %s272 = sphi 0, %s258
      %s282 = sphi 0, %s284
      %s285 = sphi 0, %s282
      %s286 = sphi 0, %s285
      %s302 = sphi 0, %s286
    $region4: #{tpu_custom_call.1} parent=1 // loop_header_branch
      %23 = sbr.rel (%p21) target = $region8
    $region5: #{tpu_custom_call.1} parent=1 // loop_body
      %s25 = ssub.s32 %s20, 1
      %s26 = ssub.s32 %s20, 2
      %s33 = sadd.s32 1, %s28
      %p34 = scmp.ge.s32.totalorder %s33, 1
      %s35 = scalar_select %p34, 0, %s33
      %s36 = sadd.s32 1, %s27
      %s37 = scalar_select %p34, %s36, %s27
      %p38 = scmp.ge.s32.totalorder %s37, 4
      %s39 = scalar_select %p38, 0, %s37
      %s40 = ssub.s32 %s28, %s35
      %p41 = scmp.eq.s32.totalorder %s40, 0
      %s43 = sadd.s32 %s42, 1
      %s44 = scalar_select %p41, %s42, %s43
      %p47 = pneg %p41
      %p48 = scmp.eq.s32.totalorder %s20, 3
      %p49 = por %p47, %p48
      %p50 = scmp.ne.s32.totalorder %s42, %s45
      %p51 = scmp.eq.s32.totalorder %s20, 0
      %p52 = por %p50, %p51
      %p53 = scmp.ne.s32.totalorder %s42, %s45
      %p54 = scmp.eq.s32.totalorder %s25, 3
      %p55 = por %p53, %p54
      %p56 = scmp.ne.s32.totalorder %s45, %s46
      %p57 = scmp.eq.s32.totalorder %s25, 0
      %p58 = por %p56, %p57
      %p59 = scmp.ne.s32.totalorder %s45, %s46
      %p60 = scmp.eq.s32.totalorder %s26, 3
      %p61 = por %p59, %p60
      %p63 = scmp.ne.s32.totalorder %s46, %s62
      %p64 = scmp.eq.s32.totalorder %s26, 0
      %p65 = por %p63, %p64
      %s67 = sadd.s32 %s66, 1
      %p70 = scmp.eq.s32.totalorder %s20, 3
      %p71 = scmp.ne.s32.totalorder %s66, %s68
      %p72 = scmp.eq.s32.totalorder %s20, 0
      %p73 = por %p71, %p72
      %p74 = scmp.ne.s32.totalorder %s66, %s68
      %p75 = scmp.eq.s32.totalorder %s25, 3
      %p76 = por %p74, %p75
      %p77 = scmp.ne.s32.totalorder %s68, %s69
      %p78 = scmp.eq.s32.totalorder %s25, 0
      %p79 = por %p77, %p78
      %p80 = scmp.ne.s32.totalorder %s68, %s69
      %p81 = scmp.eq.s32.totalorder %s26, 3
      %p82 = por %p80, %p81
      %p84 = scmp.ne.s32.totalorder %s69, %s83
      %p85 = scmp.eq.s32.totalorder %s26, 0
      %p86 = por %p84, %p85
      %s88 = sadd.s32 %s87, 1
      %p91 = scmp.eq.s32.totalorder %s20, 3
      %p92 = scmp.ne.s32.totalorder %s87, %s89
      %p93 = scmp.eq.s32.totalorder %s20, 0
      %p94 = por %p92, %p93
      %p95 = scmp.ne.s32.totalorder %s87, %s89
      %p96 = scmp.eq.s32.totalorder %s25, 3
      %p97 = por %p95, %p96
      %p98 = scmp.ne.s32.totalorder %s89, %s90
      %p99 = scmp.eq.s32.totalorder %s25, 0
      %p100 = por %p98, %p99
      %p101 = scmp.ne.s32.totalorder %s89, %s90
      %p102 = scmp.eq.s32.totalorder %s26, 3
      %p103 = por %p101, %p102
      %p105 = scmp.ne.s32.totalorder %s90, %s104
      %p106 = scmp.eq.s32.totalorder %s26, 0
      %p107 = por %p105, %p106
      %s109 = sadd.s32 %s108, 1
      %p112 = scmp.eq.s32.totalorder %s20, 3
      %p113 = scmp.ne.s32.totalorder %s108, %s110
      %p114 = scmp.eq.s32.totalorder %s20, 0
      %p115 = por %p113, %p114
      %p116 = scmp.ne.s32.totalorder %s108, %s110
      %p117 = scmp.eq.s32.totalorder %s25, 3
      %p118 = por %p116, %p117
      %p119 = scmp.ne.s32.totalorder %s110, %s111
      %p120 = scmp.eq.s32.totalorder %s25, 0
      %p121 = por %p119, %p120
      %p122 = scmp.ne.s32.totalorder %s110, %s111
      %p123 = scmp.eq.s32.totalorder %s26, 3
      %p124 = por %p122, %p123
      %p126 = scmp.ne.s32.totalorder %s111, %s125
      %p127 = scmp.eq.s32.totalorder %s26, 0
      %p128 = por %p126, %p127
      %s130 = sadd.s32 %s129, 1
      %p133 = scmp.eq.s32.totalorder %s20, 3
      %p134 = scmp.ne.s32.totalorder %s129, %s131
      %p135 = scmp.eq.s32.totalorder %s20, 0
      %p136 = por %p134, %p135
      %p137 = scmp.ne.s32.totalorder %s129, %s131
      %p138 = scmp.eq.s32.totalorder %s25, 3
      %p139 = por %p137, %p138
      %p140 = scmp.ne.s32.totalorder %s131, %s132
      %p141 = scmp.eq.s32.totalorder %s25, 0
      %p142 = por %p140, %p141
      %p143 = scmp.ne.s32.totalorder %s131, %s132
      %p144 = scmp.eq.s32.totalorder %s26, 3
      %p145 = por %p143, %p144
      %p147 = scmp.ne.s32.totalorder %s132, %s146
      %p148 = scmp.eq.s32.totalorder %s26, 0
      %p149 = por %p147, %p148
      %s151 = sadd.s32 %s150, 1
      %p154 = scmp.eq.s32.totalorder %s20, 3
      %p155 = scmp.ne.s32.totalorder %s150, %s152
      %p156 = scmp.eq.s32.totalorder %s20, 0
      %p157 = por %p155, %p156
      %p158 = scmp.ne.s32.totalorder %s150, %s152
      %p159 = scmp.eq.s32.totalorder %s25, 3
      %p160 = por %p158, %p159
      %p161 = scmp.ne.s32.totalorder %s152, %s153
      %p162 = scmp.eq.s32.totalorder %s25, 0
      %p163 = por %p161, %p162
      %p164 = scmp.ne.s32.totalorder %s152, %s153
      %p165 = scmp.eq.s32.totalorder %s26, 3
      %p166 = por %p164, %p165
      %p168 = scmp.ne.s32.totalorder %s153, %s167
      %p169 = scmp.eq.s32.totalorder %s26, 0
      %p170 = por %p168, %p169
      %s172 = sadd.s32 %s171, 1
      %p175 = scmp.eq.s32.totalorder %s20, 3
      %p176 = scmp.ne.s32.totalorder %s171, %s173
      %p177 = scmp.eq.s32.totalorder %s20, 0
      %p178 = por %p176, %p177
      %p179 = scmp.ne.s32.totalorder %s171, %s173
      %p180 = scmp.eq.s32.totalorder %s25, 3
      %p181 = por %p179, %p180
      %p182 = scmp.ne.s32.totalorder %s173, %s174
      %p183 = scmp.eq.s32.totalorder %s25, 0
      %p184 = por %p182, %p183
      %p185 = scmp.ne.s32.totalorder %s173, %s174
      %p186 = scmp.eq.s32.totalorder %s26, 3
      %p187 = por %p185, %p186
      %p189 = scmp.ne.s32.totalorder %s174, %s188
      %p190 = scmp.eq.s32.totalorder %s26, 0
      %p191 = por %p189, %p190
      %s193 = sadd.s32 %s192, 1
      %p196 = scmp.eq.s32.totalorder %s20, 3
      %p197 = scmp.ne.s32.totalorder %s192, %s194
      %p198 = scmp.eq.s32.totalorder %s20, 0
      %p199 = por %p197, %p198
      %p200 = scmp.ne.s32.totalorder %s192, %s194
      %p201 = scmp.eq.s32.totalorder %s25, 3
      %p202 = por %p200, %p201
      %p203 = scmp.ne.s32.totalorder %s194, %s195
      %p204 = scmp.eq.s32.totalorder %s25, 0
      %p205 = por %p203, %p204
      %p206 = scmp.ne.s32.totalorder %s194, %s195
      %p207 = scmp.eq.s32.totalorder %s26, 3
      %p208 = por %p206, %p207
      %p210 = scmp.ne.s32.totalorder %s195, %s209
      %p211 = scmp.eq.s32.totalorder %s26, 0
      %p212 = por %p210, %p211
      %s214 = sadd.s32 %s213, 1
      %p217 = scmp.eq.s32.totalorder %s20, 3
      %p218 = scmp.ne.s32.totalorder %s213, %s215
      %p219 = scmp.eq.s32.totalorder %s20, 0
      %p220 = por %p218, %p219
      %p221 = scmp.ne.s32.totalorder %s213, %s215
      %p222 = scmp.eq.s32.totalorder %s25, 3
      %p223 = por %p221, %p222
      %p224 = scmp.ne.s32.totalorder %s215, %s216
      %p225 = scmp.eq.s32.totalorder %s25, 0
      %p226 = por %p224, %p225
      %p227 = scmp.ne.s32.totalorder %s215, %s216
      %p228 = scmp.eq.s32.totalorder %s26, 3
      %p229 = por %p227, %p228
      %p231 = scmp.ne.s32.totalorder %s216, %s230
      %p232 = scmp.eq.s32.totalorder %s26, 0
      %p233 = por %p231, %p232
      %s235 = sadd.s32 %s234, 1
      %p238 = scmp.eq.s32.totalorder %s20, 3
      %p239 = scmp.ne.s32.totalorder %s234, %s236
      %p240 = scmp.eq.s32.totalorder %s20, 0
      %p241 = por %p239, %p240
      %p242 = scmp.ne.s32.totalorder %s234, %s236
      %p243 = scmp.eq.s32.totalorder %s25, 3
      %p244 = por %p242, %p243
      %p245 = scmp.ne.s32.totalorder %s236, %s237
      %p246 = scmp.eq.s32.totalorder %s25, 0
      %p247 = por %p245, %p246
      %p248 = scmp.ne.s32.totalorder %s236, %s237
      %p249 = scmp.eq.s32.totalorder %s26, 3
      %p250 = por %p248, %p249
      %p252 = scmp.ne.s32.totalorder %s237, %s251
      %p253 = scmp.eq.s32.totalorder %s26, 0
      %p254 = por %p252, %p253
      %s256 = sadd.s32 %s255, 1
      %p259 = scmp.eq.s32.totalorder %s20, 3
      %p260 = scmp.ne.s32.totalorder %s255, %s257
      %p261 = scmp.eq.s32.totalorder %s20, 0
      %p262 = por %p260, %p261
      %p263 = scmp.ne.s32.totalorder %s255, %s257
      %p264 = scmp.eq.s32.totalorder %s25, 3
      %p265 = por %p263, %p264
      %p266 = scmp.ne.s32.totalorder %s257, %s258
      %p267 = scmp.eq.s32.totalorder %s25, 0
      %p268 = por %p266, %p267
      %p269 = scmp.ne.s32.totalorder %s257, %s258
      %p270 = scmp.eq.s32.totalorder %s26, 3
      %p271 = por %p269, %p270
      %p273 = scmp.ne.s32.totalorder %s258, %s272
      %p274 = scmp.eq.s32.totalorder %s26, 0
      %p275 = por %p273, %p274
      %p276 = scmp.eq.s32.totalorder %s27, 3
      %s277 = scalar_select %p276, %s28, 0
      %p278 = scmp.eq.s32.totalorder %s39, 3
      %s279 = scalar_select %p278, %s35, 0
      %s280 = ssub.s32 %s277, %s279
      %p281 = scmp.eq.s32.totalorder %s280, 0
      %s283 = sadd.s32 %s282, 1
      %s284 = scalar_select %p281, %s282, %s283
      %p287 = pneg %p281
      %p288 = scmp.eq.s32.totalorder %s20, 3
      %p289 = por %p287, %p288
      %p290 = scmp.ne.s32.totalorder %s282, %s285
      %p291 = scmp.eq.s32.totalorder %s20, 0
      %p292 = por %p290, %p291
      %p293 = scmp.ne.s32.totalorder %s282, %s285
      %p294 = scmp.eq.s32.totalorder %s25, 3
      %p295 = por %p293, %p294
      %p296 = scmp.ne.s32.totalorder %s285, %s286
      %p297 = scmp.eq.s32.totalorder %s25, 0
      %p298 = por %p296, %p297
      %p299 = scmp.ne.s32.totalorder %s285, %s286
      %p300 = scmp.eq.s32.totalorder %s26, 3
      %p301 = por %p299, %p300
      %p303 = scmp.ne.s32.totalorder %s286, %s302
      %p304 = scmp.eq.s32.totalorder %s26, 0
      %p305 = por %p303, %p304
      %p306 = scmp.le.s32.totalorder 1, %s20
      %p307 = scmp.lt.s32.totalorder %s20, 5
      %p308 = pnand %p306, %p307
      %p309 = pneg %p308
      // Predicated region
      $region9: #{tpu_custom_call.1} parent=5 // pred_check
        _
      $region10: #{tpu_custom_call.1} parent=5 // pred_check_branch
        %311 = sbr.rel (%p308) target = $region12
      $region11: #{tpu_custom_call.1} parent=5 // pred_region
        %s312 = ssub.s32 %s20, 1
        // Predicated region
        $region13: #{tpu_custom_call.1} parent=11 // pred_check
          %p313 = pneg %p58
        $region14: #{tpu_custom_call.1} parent=11 // pred_check_branch
          %315 = sbr.rel (%p313) target = $region16
        $region15: #{tpu_custom_call.1} parent=11 // pred_region
          %p316 = scmp.lt.s32.totalorder %s30, 0
          %s317 = scalar_select %p316, %s30, 0
          %s318 = smul.addr %s317, 8
          %s319 = scalar_lea.vmem %s0, %s318
        $region16: #{tpu_custom_call.1} parent=11 // pred_fallthru
          _
        // Predicated region
        $region17: #{tpu_custom_call.1} parent=11 // pred_check
          %p320 = pneg %p79
        $region18: #{tpu_custom_call.1} parent=11 // pred_check_branch
          %322 = sbr.rel (%p320) target = $region20
        $region19: #{tpu_custom_call.1} parent=11 // pred_region
          _
        $region20: #{tpu_custom_call.1} parent=11 // pred_fallthru
          _
        // Predicated region
        $region21: #{tpu_custom_call.1} parent=11 // pred_check
          %p323 = pneg %p100
        $region22: #{tpu_custom_call.1} parent=11 // pred_check_branch
          %325 = sbr.rel (%p323) target = $region24
        $region23: #{tpu_custom_call.1} parent=11 // pred_region
          _
        $region24: #{tpu_custom_call.1} parent=11 // pred_fallthru
          _
        // Predicated region
        $region25: #{tpu_custom_call.1} parent=11 // pred_check
          %p326 = pneg %p121
        $region26: #{tpu_custom_call.1} parent=11 // pred_check_branch
          %328 = sbr.rel (%p326) target = $region28
        $region27: #{tpu_custom_call.1} parent=11 // pred_region
          _
        $region28: #{tpu_custom_call.1} parent=11 // pred_fallthru
          _
        // Predicated region
        $region29: #{tpu_custom_call.1} parent=11 // pred_check
          %p329 = pneg %p142
        $region30: #{tpu_custom_call.1} parent=11 // pred_check_branch
          %331 = sbr.rel (%p329) target = $region32
        $region31: #{tpu_custom_call.1} parent=11 // pred_region
          _
        $region32: #{tpu_custom_call.1} parent=11 // pred_fallthru
          _
        // Predicated region
        $region33: #{tpu_custom_call.1} parent=11 // pred_check
          %p332 = pneg %p163
        $region34: #{tpu_custom_call.1} parent=11 // pred_check_branch
          %334 = sbr.rel (%p332) target = $region36
        $region35: #{tpu_custom_call.1} parent=11 // pred_region
          _
        $region36: #{tpu_custom_call.1} parent=11 // pred_fallthru
          _
        // Predicated region
        $region37: #{tpu_custom_call.1} parent=11 // pred_check
          %p335 = pneg %p184
        $region38: #{tpu_custom_call.1} parent=11 // pred_check_branch
          %337 = sbr.rel (%p335) target = $region40
        $region39: #{tpu_custom_call.1} parent=11 // pred_region
          _
        $region40: #{tpu_custom_call.1} parent=11 // pred_fallthru
          _
        // Predicated region
        $region41: #{tpu_custom_call.1} parent=11 // pred_check
          %p338 = pneg %p205
        $region42: #{tpu_custom_call.1} parent=11 // pred_check_branch
          %340 = sbr.rel (%p338) target = $region44
        $region43: #{tpu_custom_call.1} parent=11 // pred_region
          _
        $region44: #{tpu_custom_call.1} parent=11 // pred_fallthru
          _
        // Predicated region
        $region45: #{tpu_custom_call.1} parent=11 // pred_check
          %p341 = pneg %p226
        $region46: #{tpu_custom_call.1} parent=11 // pred_check_branch
          %343 = sbr.rel (%p341) target = $region48
        $region47: #{tpu_custom_call.1} parent=11 // pred_region
          _
        $region48: #{tpu_custom_call.1} parent=11 // pred_fallthru
          _
        // Predicated region
        $region49: #{tpu_custom_call.1} parent=11 // pred_check
          %p344 = pneg %p247
        $region50: #{tpu_custom_call.1} parent=11 // pred_check_branch
          %346 = sbr.rel (%p344) target = $region52
        $region51: #{tpu_custom_call.1} parent=11 // pred_region
          _
        $region52: #{tpu_custom_call.1} parent=11 // pred_fallthru
          _
        // Predicated region
        $region53: #{tpu_custom_call.1} parent=11 // pred_check
          %p347 = pneg %p268
        $region54: #{tpu_custom_call.1} parent=11 // pred_check_branch
          %349 = sbr.rel (%p347) target = $region56
        $region55: #{tpu_custom_call.1} parent=11 // pred_region
          _
        $region56: #{tpu_custom_call.1} parent=11 // pred_fallthru
          _
      $region12: #{tpu_custom_call.1} parent=5 // pred_fallthru
        _
      %p350 = scmp.lt.s32.totalorder %s20, 4
      // Predicated region
      $region57: #{tpu_custom_call.1} parent=5 // pred_check
        %p351 = pneg %p350
      $region58: #{tpu_custom_call.1} parent=5 // pred_check_branch
        %353 = sbr.rel (%p351) target = $region60
      $region59: #{tpu_custom_call.1} parent=5 // pred_region
        _
      $region60: #{tpu_custom_call.1} parent=5 // pred_fallthru
        _
      %p354 = scmp.le.s32.totalorder 1, %s20
      %p355 = scmp.lt.s32.totalorder %s20, 5
      %p356 = pnand %p354, %p355
      %p357 = pneg %p356
      // Predicated region
      $region61: #{tpu_custom_call.1} parent=5 // pred_check
        _
      $region62: #{tpu_custom_call.1} parent=5 // pred_check_branch
        %359 = sbr.rel (%p356) target = $region64
      $region63: #{tpu_custom_call.1} parent=5 // pred_region
        %s360 = ssub.s32 %s20, 1
        %p361 = scmp.lt.s32.totalorder %s30, 0
        %s362 = scalar_select %p361, %s30, 0
        %s363 = smul.addr %s362, 8
        %s364 = scalar_lea.vmem %s0, %s363
        %p365 = pneg %p58
        %p366 = pneg %p55
        %p367 = pneg %p79
        %p368 = pneg %p76
        %p369 = pneg %p100
        %p370 = pneg %p97
        %p371 = pneg %p121
        %p372 = pneg %p118
        %p373 = pneg %p142
        %p374 = pneg %p139
        %p375 = pneg %p163
        %p376 = pneg %p160
        %p377 = pneg %p184
        %p378 = pneg %p181
        %p379 = pneg %p205
        %p380 = pneg %p202
        %p381 = pneg %p226
        %p382 = pneg %p223
        %p383 = pneg %p247
        %p384 = pneg %p244
        %p385 = pneg %p268
        %p386 = pneg %p265
        %p387 = pneg %p298
        %p388 = pneg %p295
        %s389 = sand.u32 %s285, 1
        %s390 = scalar_lea.sflag [#allocation9], %s389
        %s391 = sand.u32 %s285, 1
        %s392 = smul.addr %s391, 8
        %s393 = scalar_lea.vmem [#allocation8], %s392
        %p394 = scmp.lt.s32.totalorder %s30, 0
        %s395 = scalar_select %p394, %s30, 0
        %s396 = smul.addr %s395, 8
        %s397 = scalar_lea.vmem %s0, %s396
        %p398 = scmp.eq.s32.totalorder %s29, 3
        %s399 = scalar_select %p398, %s30, 0
        %p400 = scmp.eq.s32.totalorder %s29, 0
        %p401 = scmp.eq.s32.totalorder %s30, 0
        %p402 = pnand %p400, %p401
        %p403 = pneg %p402
        // Predicated region
        $region65: #{tpu_custom_call.1} parent=63 // pred_check
          _
        $region66: #{tpu_custom_call.1} parent=63 // pred_check_branch
          %405 = sbr.rel (%p402) target = $region68
        $region67: #{tpu_custom_call.1} parent=63 // pred_region
          %vm406 = vcmask 7168
          %407 = vst.msk [vmem:[#allocation2] sm:$0xff] %vm406, 0.0
          %408 = vst.msk [vmem:[#allocation3] sm:$0xff] %vm406, 0.0
          %409 = vst.msk [vmem:[#allocation4] sm:$0xff] %vm406, 0.0
          %410 = vst.msk [vmem:[#allocation5] sm:$0xff] %vm406, 0.0
          %411 = vst.msk [vmem:[#allocation6] sm:$0xff] %vm406, 0.0
          %412 = vst.msk [vmem:[#allocation7] sm:$0xff] %vm406, 0.0
        $region68: #{tpu_custom_call.1} parent=63 // pred_fallthru
          _
        %p413 = scmp.eq.s32.totalorder %s29, 1
        %p414 = pnand %p413, %p401
        %p415 = pneg %p414
        // Predicated region
        $region69: #{tpu_custom_call.1} parent=63 // pred_check
          _
        $region70: #{tpu_custom_call.1} parent=63 // pred_check_branch
          %417 = sbr.rel (%p414) target = $region72
        $region71: #{tpu_custom_call.1} parent=63 // pred_region
          %v418 = vld [vmem:[#allocation2] sm:$0xff]
          %v419 = vmul.f32 %v418, 0.03125
          %v420 = vld [vmem:[#allocation3] sm:$0xff]
          %v421 = vmul.f32 %v420, 0.03125
          %v422 = vmul.f32 %v419, %v419
          %v423 = vsub.f32 %v421, %v422
          %v424 = vmax.f32 %v423, 0.0
          %v425 = vld [vmem:[%s5] sm:$0xff]
          %v426 = vadd.f32 %v424, 1e-05
          %v427 = vrsqrt.pop %v426
          %v428 = vmul.f32 %v427, %v426
          %v429 = vmul.f32 %v428, %v427
          %v430 = vmul.f32 0.5, %v429
          %v431 = vsub.f32 1.5, %v430
          %v432 = vmul.f32 %v427, %v431
          %vm433 = vweird.f32 %v426
          %vm434 = vweird.f32 %v427
          %vm435 = vmor %vm433, %vm434
          %v436 = vsel %vm435, %v427, %v432
          %v437 = vmul.f32 %v425, %v436
          %vm438 = vcmask 7168
          %439 = vst.msk [vmem:[#allocation2] sm:$0xff] %vm438, %v437
          %v440 = vld [vmem:[%s6] sm:$0xff]
          %v441 = vmul.f32 %v419, %v437
          %v442 = vsub.f32 %v440, %v441
          %443 = vst.msk [vmem:[#allocation3] sm:$0xff] %vm438, %v442
        $region72: #{tpu_custom_call.1} parent=63 // pred_fallthru
          _
        %p444 = scmp.eq.s32.totalorder %s29, 2
        %p445 = pnand %p444, %p401
        %p446 = pneg %p445
        // Predicated region
        $region73: #{tpu_custom_call.1} parent=63 // pred_check
          _
        $region74: #{tpu_custom_call.1} parent=63 // pred_check_branch
          %448 = sbr.rel (%p445) target = $region76
        $region75: #{tpu_custom_call.1} parent=63 // pred_region
          %v449 = vld [vmem:[#allocation4] sm:$0xff]
          %v450 = vmul.f32 %v449, 0.03125
          %v451 = vld [vmem:[#allocation5] sm:$0xff]
          %v452 = vmul.f32 %v451, 0.03125
          %v453 = vmul.f32 %v450, %v450
          %v454 = vsub.f32 %v452, %v453
          %v455 = vmax.f32 %v454, 0.0
          %v456 = vld [vmem:[%s7] sm:$0xff]
          %v457 = vadd.f32 %v455, 1e-05
          %v458 = vrsqrt.pop %v457
          %v459 = vmul.f32 %v458, %v457
          %v460 = vmul.f32 %v459, %v458
          %v461 = vmul.f32 0.5, %v460
          %v462 = vsub.f32 1.5, %v461
          %v463 = vmul.f32 %v458, %v462
          %vm464 = vweird.f32 %v457
          %vm465 = vweird.f32 %v458
          %vm466 = vmor %vm464, %vm465
          %v467 = vsel %vm466, %v458, %v463
          %v468 = vmul.f32 %v456, %v467
          %vm469 = vcmask 7168
          %470 = vst.msk [vmem:[#allocation4] sm:$0xff] %vm469, %v468
          %v471 = vld [vmem:[%s8] sm:$0xff]
          %v472 = vmul.f32 %v450, %v468
          %v473 = vsub.f32 %v471, %v472
          %474 = vst.msk [vmem:[#allocation5] sm:$0xff] %vm469, %v473
        $region76: #{tpu_custom_call.1} parent=63 // pred_fallthru
          _
        %p475 = scmp.eq.s32.totalorder %s29, 3
        %p476 = pnand %p475, %p401
        %p477 = pneg %p476
        // Predicated region
        $region77: #{tpu_custom_call.1} parent=63 // pred_check
          _
        $region78: #{tpu_custom_call.1} parent=63 // pred_check_branch
          %479 = sbr.rel (%p476) target = $region80
        $region79: #{tpu_custom_call.1} parent=63 // pred_region
          %v480 = vld [vmem:[#allocation6] sm:$0xff]
          %v481 = vmul.f32 %v480, 0.03125
          %v482 = vld [vmem:[#allocation7] sm:$0xff]
          %v483 = vmul.f32 %v482, 0.03125
          %v484 = vmul.f32 %v481, %v481
          %v485 = vsub.f32 %v483, %v484
          %v486 = vmax.f32 %v485, 0.0
          %v487 = vld [vmem:[%s9] sm:$0xff]
          %v488 = vadd.f32 %v486, 1e-05
          %v489 = vrsqrt.pop %v488
          %v490 = vmul.f32 %v489, %v488
          %v491 = vmul.f32 %v490, %v489
          %v492 = vmul.f32 0.5, %v491
          %v493 = vsub.f32 1.5, %v492
          %v494 = vmul.f32 %v489, %v493
          %vm495 = vweird.f32 %v488
          %vm496 = vweird.f32 %v489
          %vm497 = vmor %vm495, %vm496
          %v498 = vsel %vm497, %v489, %v494
          %v499 = vmul.f32 %v487, %v498
          %vm500 = vcmask 7168
          %501 = vst.msk [vmem:[#allocation6] sm:$0xff] %vm500, %v499
          %v502 = vld [vmem:[%s10] sm:$0xff]
          %v503 = vmul.f32 %v481, %v499
          %v504 = vsub.f32 %v502, %v503
          %505 = vst.msk [vmem:[#allocation7] sm:$0xff] %vm500, %v504
        $region80: #{tpu_custom_call.1} parent=63 // pred_fallthru
          _
        %v506 = vld [vmem:[%s397] sm:$0xff]
        %v507 = vld [vmem:[%s1] sm:$0xff]
        %vm508 = vcmask 64512
        %v510 = vsel %vm508, %v507, 0
        %512 = vmatpush.msra.mxu0 0.0
        %513 = vmatpush.msra.mxu0 0.0
        %514 = vmatpush.msra.mxu0 0.0
        %515 = vmatpush.msra.mxu0 0.0
        %516 = vmatpush.msra.mxu0 0.0
        %517 = vmatpush.msra.mxu0 0.0
        %518 = vmatpush.msra.mxu0 0.0
        %519 = vmatpush.msra.mxu0 0.0
        %520 = vmatpush.msra.mxu0 0.0
        %521 = vmatpush.msra.mxu0 0.0
        %522 = vmatpush.msra.mxu0 0.0
        %523 = vmatpush.msra.mxu0 0.0
        %524 = vmatpush.msra.mxu0 0.0
        %525 = vmatpush.msra.mxu0 0.0
        %526 = vmatpush.msra.mxu0 0.0
        %527 = vmatpush.msra.mxu0 %v506
        %528 = vmatmul.f32.gmra.mxu0 %v510
        %v529 = vpop.f32.mrf.mxu0
        %v530 = vadd.f32 0.0, %v529
        %531 = vdwg.mxu0
        // Predicated region
        $region81: #{tpu_custom_call.1} parent=63 // pred_check
          %p532 = pneg %p400
        $region82: #{tpu_custom_call.1} parent=63 // pred_check_branch
          %534 = sbr.rel (%p532) target = $region84
        $region83: #{tpu_custom_call.1} parent=63 // pred_region
          %v535 = vld [vmem:[#allocation2] sm:$0xff]
          %vm536 = vcmask 261120
          %v537 = vsel %vm536, %v530, 0.0
          %538 = vadd.xlane.f32.xlu0 %v537
          %v539 = vpop.xlane.xlu0 %538
          %v540 = vadd.f32 %v535, %v539
          %vm541 = vcmask 7168
          %542 = vst.msk [vmem:[#allocation2] sm:$0xff] %vm541, %v540
          %v543 = vld [vmem:[#allocation3] sm:$0xff]
          %v544 = vmul.f32 %v530, %v530
          %v545 = vsel %vm536, %v544, 0.0
          %546 = vadd.xlane.f32.xlu0 %v545
          %v547 = vpop.xlane.xlu0 %546
          %v548 = vadd.f32 %v543, %v547
          %549 = vst.msk [vmem:[#allocation3] sm:$0xff] %vm541, %v548
        $region84: #{tpu_custom_call.1} parent=63 // pred_fallthru
          _
        %p550 = scmp.ge.s32.totalorder %s29, 1
        // Predicated region
        $region85: #{tpu_custom_call.1} parent=63 // pred_check
          %p551 = pneg %p550
        $region86: #{tpu_custom_call.1} parent=63 // pred_check_branch
          %553 = sbr.rel (%p551) target = $region88
        $region87: #{tpu_custom_call.1} parent=63 // pred_region
          %v554 = vld [vmem:[#allocation2] sm:$0xff]
          %556 = vset.pattern.permute.xlu0 0
          %557 = vperm.xlu0 %556, %v554
          %v558 = vpop.permute.xlu0 %557
          %v560 = vmul.f32 %v530, %v558
          %v561 = vld [vmem:[#allocation3] sm:$0xff]
          %563 = vset.pattern.permute.xlu0 0
          %564 = vperm.xlu0 %563, %v561
          %v565 = vpop.permute.xlu0 %564
          %v567 = vadd.f32 %v560, %v565
          %v568 = vmul.f32 %v567, 0.70710677
          %v569 = vand.u32 2147483647, %v568
          %v570 = vmul.f32 %v569, 0.3275911
          %v571 = vadd.f32 %v570, 1.0
          %v572 = vrcp.pop %v571
          %v573 = vmul.f32 %v572, 1.0614054
          %v574 = vadd.f32 %v573, -1.4531521
          %v575 = vmul.f32 %v572, %v574
          %v576 = vadd.f32 %v575, 1.4214138
          %v577 = vmul.f32 %v572, %v576
          %v578 = vadd.f32 %v577, -0.28449672
          %v579 = vmul.f32 %v572, %v578
          %v580 = vadd.f32 %v579, 0.2548296
          %v581 = vmul.f32 %v572, %v580
          %v582 = vsub.f32 0.0, %v569
          %v583 = vmul.f32 %v582, %v569
          %v584 = vmul.f32 %v583, 1.442695
          %v585 = vpow.pop %v584
          %v586 = vmul.f32 %v581, %v585
          %v587 = vsub.f32 1.0, %v586
          %vm588 = vcmp.ge.f32.partialorder %v568, 0.0
          %v589 = vsub.f32 0.0, %v587
          %v590 = vsel %vm588, %v587, %v589
          %v591 = vmul.f32 %v567, 0.5
          %v592 = vadd.f32 %v590, 1.0
          %v593 = vmul.f32 %v591, %v592
          %v594 = vld [vmem:[%s4] sm:$0x1]
          %v595 = vld [vmem:[%s2] sm:$0xff]
          %597 = vset.pattern.permute.xlu0 2
          %598 = vperm.xlu0 %597, %v595
          %v599 = vpop.permute.xlu0 %598
          %v601 = vmul.f32 %v599, %v593
          %603 = vrot.lane.b32.xlu0 %v593, 98
          %v604 = vpop.permute.xlu0 %603
          %606 = vrot.lane.b32.xlu0 %v593, 2
          %v607 = vpop.permute.xlu0 %606
          %vm609 = vcmask 15360
          %v610 = vsel %vm609, %v604, %v607
          %vm611 = vcmp.ge.s32.totalorder %v594, 2
          %v612 = vsel %vm611, 1, 0
          %v613 = vperm.slane %v612, 0
          %vm614 = vcmp.eq.s32.totalorder %v613, 1
          %v615 = vsel %vm614, %v610, 0.0
          %616 = vset.pattern.permute.xlu0 0
          %617 = vperm.xlu0 %616, %v595
          %v618 = vpop.permute.xlu0 %617
          %v620 = vmul.f32 %v618, %v615
          %v621 = vadd.f32 %v601, %v620
          %622 = vrot.lane.b32.xlu0 %v593, 97
          %v623 = vpop.permute.xlu0 %622
          %625 = vrot.lane.b32.xlu0 %v593, 1
          %v626 = vpop.permute.xlu0 %625
          %vm628 = vcmask 7168
          %v629 = vsel %vm628, %v623, %v626
          %vm630 = vcmp.ge.s32.totalorder %v594, 1
          %v631 = vsel %vm630, 1, 0
          %v632 = vperm.slane %v631, 0
          %vm633 = vcmp.eq.s32.totalorder %v632, 1
          %v634 = vsel %vm633, %v629, 0.0
          %635 = vset.pattern.permute.xlu0 1
          %636 = vperm.xlu0 %635, %v595
          %v637 = vpop.permute.xlu0 %636
          %v639 = vmul.f32 %v637, %v634
          %v640 = vadd.f32 %v621, %v639
          %641 = vrot.lane.b32.xlu0 %v593, 127
          %v642 = vpop.permute.xlu0 %641
          %644 = vrot.lane.b32.xlu0 %v593, 31
          %v645 = vpop.permute.xlu0 %644
          %vm647 = vcmask 252928
          %v648 = vsel %vm647, %v642, %v645
          %vm649 = vcmp.lt.s32.totalorder %v594, 15
          %v650 = vsel %vm649, 1, 0
          %v651 = vperm.slane %v650, 0
          %vm652 = vcmp.eq.s32.totalorder %v651, 1
          %v653 = vsel %vm652, %v648, 0.0
          %654 = vset.pattern.permute.xlu0 3
          %655 = vperm.xlu0 %654, %v595
          %v656 = vpop.permute.xlu0 %655
          %v658 = vmul.f32 %v656, %v653
          %v659 = vadd.f32 %v640, %v658
          %660 = vrot.lane.b32.xlu0 %v593, 126
          %v661 = vpop.permute.xlu0 %660
          %663 = vrot.lane.b32.xlu0 %v593, 30
          %v664 = vpop.permute.xlu0 %663
          %vm666 = vcmask 244736
          %v667 = vsel %vm666, %v661, %v664
          %vm668 = vcmp.lt.s32.totalorder %v594, 14
          %v669 = vsel %vm668, 1, 0
          %v670 = vperm.slane %v669, 0
          %vm671 = vcmp.eq.s32.totalorder %v670, 1
          %v672 = vsel %vm671, %v667, 0.0
          %673 = vset.pattern.permute.xlu0 4
          %674 = vperm.xlu0 %673, %v595
          %v675 = vpop.permute.xlu0 %674
          %v677 = vmul.f32 %v675, %v672
          %v678 = vadd.f32 %v659, %v677
          // Predicated region
          $region89: #{tpu_custom_call.1} parent=87 // pred_check
            %p679 = pneg %p413
          $region90: #{tpu_custom_call.1} parent=87 // pred_check_branch
            %681 = sbr.rel (%p679) target = $region92
          $region91: #{tpu_custom_call.1} parent=87 // pred_region
            %v682 = vld [vmem:[#allocation4] sm:$0xff]
            %vm683 = vcmask 261120
            %v684 = vsel %vm683, %v678, 0.0
            %685 = vadd.xlane.f32.xlu0 %v684
            %v686 = vpop.xlane.xlu0 %685
            %v687 = vadd.f32 %v682, %v686
            %688 = vst.msk [vmem:[#allocation4] sm:$0xff] %vm628, %v687
            %v689 = vld [vmem:[#allocation5] sm:$0xff]
            %v690 = vmul.f32 %v678, %v678
            %v691 = vsel %vm683, %v690, 0.0
            %692 = vadd.xlane.f32.xlu0 %v691
            %v693 = vpop.xlane.xlu0 %692
            %v694 = vadd.f32 %v689, %v693
            %695 = vst.msk [vmem:[#allocation5] sm:$0xff] %vm628, %v694
          $region92: #{tpu_custom_call.1} parent=87 // pred_fallthru
            _
          %p696 = scmp.ge.s32.totalorder %s29, 2
          // Predicated region
          $region93: #{tpu_custom_call.1} parent=87 // pred_check
            %p697 = pneg %p696
          $region94: #{tpu_custom_call.1} parent=87 // pred_check_branch
            %699 = sbr.rel (%p697) target = $region96
          $region95: #{tpu_custom_call.1} parent=87 // pred_region
            %v700 = vld [vmem:[#allocation4] sm:$0xff]
            %702 = vset.pattern.permute.xlu0 0
            %703 = vperm.xlu0 %702, %v700
            %v704 = vpop.permute.xlu0 %703
            %v706 = vmul.f32 %v678, %v704
            %v707 = vld [vmem:[#allocation5] sm:$0xff]
            %709 = vset.pattern.permute.xlu0 0
            %710 = vperm.xlu0 %709, %v707
            %v711 = vpop.permute.xlu0 %710
            %v713 = vadd.f32 %v706, %v711
            %v714 = vmul.f32 %v713, 0.70710677
            %v715 = vand.u32 2147483647, %v714
            %v716 = vmul.f32 %v715, 0.3275911
            %v717 = vadd.f32 %v716, 1.0
            %v718 = vrcp.pop %v717
            %v719 = vmul.f32 %v718, 1.0614054
            %v720 = vadd.f32 %v719, -1.4531521
            %v721 = vmul.f32 %v718, %v720
            %v722 = vadd.f32 %v721, 1.4214138
            %v723 = vmul.f32 %v718, %v722
            %v724 = vadd.f32 %v723, -0.28449672
            %v725 = vmul.f32 %v718, %v724
            %v726 = vadd.f32 %v725, 0.2548296
            %v727 = vmul.f32 %v718, %v726
            %v728 = vsub.f32 0.0, %v715
            %v729 = vmul.f32 %v728, %v715
            %v730 = vmul.f32 %v729, 1.442695
            %v731 = vpow.pop %v730
            %v732 = vmul.f32 %v727, %v731
            %v733 = vsub.f32 1.0, %v732
            %vm734 = vcmp.ge.f32.partialorder %v714, 0.0
            %v735 = vsub.f32 0.0, %v733
            %v736 = vsel %vm734, %v733, %v735
            %v737 = vmul.f32 %v713, 0.5
            %v738 = vadd.f32 %v736, 1.0
            %v739 = vmul.f32 %v737, %v738
            %v740 = vld [vmem:[%s3] sm:$0xff]
            %v742 = vsel %vm508, %v740, 0
            %744 = vmatpush.msra.mxu0 0.0
            %745 = vmatpush.msra.mxu0 0.0
            %746 = vmatpush.msra.mxu0 0.0
            %747 = vmatpush.msra.mxu0 0.0
            %748 = vmatpush.msra.mxu0 0.0
            %749 = vmatpush.msra.mxu0 0.0
            %750 = vmatpush.msra.mxu0 0.0
            %751 = vmatpush.msra.mxu0 0.0
            %752 = vmatpush.msra.mxu0 0.0
            %753 = vmatpush.msra.mxu0 0.0
            %754 = vmatpush.msra.mxu0 0.0
            %755 = vmatpush.msra.mxu0 0.0
            %756 = vmatpush.msra.mxu0 0.0
            %757 = vmatpush.msra.mxu0 0.0
            %758 = vmatpush.msra.mxu0 0.0
            %759 = vmatpush.msra.mxu0 %v739
            %760 = vmatmul.f32.gmra.mxu0 %v742
            %v761 = vpop.f32.mrf.mxu0
            %v762 = vadd.f32 0.0, %v761
            %763 = vdwg.mxu0
            // Predicated region
            $region97: #{tpu_custom_call.1} parent=95 // pred_check
              %p764 = pneg %p444
            $region98: #{tpu_custom_call.1} parent=95 // pred_check_branch
              %766 = sbr.rel (%p764) target = $region100
            $region99: #{tpu_custom_call.1} parent=95 // pred_region
              %v767 = vld [vmem:[#allocation6] sm:$0xff]
              %vm768 = vcmask 261120
              %v769 = vsel %vm768, %v762, 0.0
              %770 = vadd.xlane.f32.xlu0 %v769
              %v771 = vpop.xlane.xlu0 %770
              %v772 = vadd.f32 %v767, %v771
              %773 = vst.msk [vmem:[#allocation6] sm:$0xff] %vm628, %v772
              %v774 = vld [vmem:[#allocation7] sm:$0xff]
              %v775 = vmul.f32 %v762, %v762
              %v776 = vsel %vm768, %v775, 0.0
              %777 = vadd.xlane.f32.xlu0 %v776
              %v778 = vpop.xlane.xlu0 %777
              %v779 = vadd.f32 %v774, %v778
              %780 = vst.msk [vmem:[#allocation7] sm:$0xff] %vm628, %v779
            $region100: #{tpu_custom_call.1} parent=95 // pred_fallthru
              _
            // Predicated region
            $region101: #{tpu_custom_call.1} parent=95 // pred_check
              %p781 = pneg %p475
            $region102: #{tpu_custom_call.1} parent=95 // pred_check_branch
              %783 = sbr.rel (%p781) target = $region104
            $region103: #{tpu_custom_call.1} parent=95 // pred_region
              %v784 = vld [vmem:[#allocation6] sm:$0xff]
              %786 = vset.pattern.permute.xlu0 0
              %787 = vperm.xlu0 %786, %v784
              %v788 = vpop.permute.xlu0 %787
              %v790 = vmul.f32 %v762, %v788
              %v791 = vld [vmem:[#allocation7] sm:$0xff]
              %793 = vset.pattern.permute.xlu0 0
              %794 = vperm.xlu0 %793, %v791
              %v795 = vpop.permute.xlu0 %794
              %v797 = vadd.f32 %v790, %v795
              %v798 = vadd.f32 %v797, %v506
              %v799 = vmul.f32 %v798, 0.70710677
              %v800 = vand.u32 2147483647, %v799
              %v801 = vmul.f32 %v800, 0.3275911
              %v802 = vadd.f32 %v801, 1.0
              %v803 = vrcp.pop %v802
              %v804 = vmul.f32 %v803, 1.0614054
              %v805 = vadd.f32 %v804, -1.4531521
              %v806 = vmul.f32 %v803, %v805
              %v807 = vadd.f32 %v806, 1.4214138
              %v808 = vmul.f32 %v803, %v807
              %v809 = vadd.f32 %v808, -0.28449672
              %v810 = vmul.f32 %v803, %v809
              %v811 = vadd.f32 %v810, 0.2548296
              %v812 = vmul.f32 %v803, %v811
              %v813 = vsub.f32 0.0, %v800
              %v814 = vmul.f32 %v813, %v800
              %v815 = vmul.f32 %v814, 1.442695
              %v816 = vpow.pop %v815
              %v817 = vmul.f32 %v812, %v816
              %v818 = vsub.f32 1.0, %v817
              %vm819 = vcmp.ge.f32.partialorder %v799, 0.0
              %v820 = vsub.f32 0.0, %v818
              %v821 = vsel %vm819, %v818, %v820
              %v822 = vmul.f32 %v798, 0.5
              %v823 = vadd.f32 %v821, 1.0
              %v824 = vmul.f32 %v822, %v823
              %vm825 = vcmask 261120
              %826 = vst.msk [vmem:[%s393] sm:$0xff] %vm825, %v824
            $region104: #{tpu_custom_call.1} parent=95 // pred_fallthru
              _
          $region96: #{tpu_custom_call.1} parent=87 // pred_fallthru
            _
        $region88: #{tpu_custom_call.1} parent=63 // pred_fallthru
          _
        %s827 = sand.u32 %s285, 1
        %s828 = scalar_lea.sflag [#allocation9], %s827
        %s829 = sand.u32 %s285, 1
        %s830 = smul.addr %s829, 8
        %s831 = scalar_lea.vmem [#allocation8], %s830
        // Predicated region
        $region105: #{tpu_custom_call.1} parent=63 // pred_check
          %p832 = pneg %p295
        $region106: #{tpu_custom_call.1} parent=63 // pred_check_branch
          %834 = sbr.rel (%p832) target = $region108
        $region107: #{tpu_custom_call.1} parent=63 // pred_region
          %p835 = scmp.eq.s32.totalorder %s29, 3
          %s836 = scalar_select %p835, %s30, 0
          %838 = vsyncadd %s828, 0
          %s839 = smul.addr %s836, 8
          %s840 = scalar_lea.hbm %s11, %s839
          %s842 = sshll.u32 %s831, 4
          %s843 = int_to_ptr.vmem [resolvable:$true] %s842
          %s844 = sshll.u32 %s840, 4
          %s845 = int_to_ptr.hbm [resolvable:$true] %s844
          %847 = dma.vmem_to_hbm [thread:$0]  %s843, 128, %s845, %s828
        $region108: #{tpu_custom_call.1} parent=63 // pred_fallthru
          _
      $region64: #{tpu_custom_call.1} parent=5 // pred_fallthru
        _
      %p848 = scmp.le.s32.totalorder 2, %s20
      // Predicated region
      $region109: #{tpu_custom_call.1} parent=5 // pred_check
        %p849 = pneg %p848
      $region110: #{tpu_custom_call.1} parent=5 // pred_check_branch
        %851 = sbr.rel (%p849) target = $region112
      $region111: #{tpu_custom_call.1} parent=5 // pred_region
        %s852 = ssub.s32 %s20, 2
        // Predicated region
        $region113: #{tpu_custom_call.1} parent=111 // pred_check
          %p853 = pneg %p301
        $region114: #{tpu_custom_call.1} parent=111 // pred_check_branch
          %855 = sbr.rel (%p853) target = $region116
        $region115: #{tpu_custom_call.1} parent=111 // pred_region
          %s856 = sand.u32 %s286, 1
          %s857 = scalar_lea.sflag [#allocation9], %s856
          %s858 = sand.u32 %s286, 1
          %s859 = smul.addr %s858, 8
          %s860 = scalar_lea.vmem [#allocation8], %s859
          %862 = dma.done %s857, 128
        $region116: #{tpu_custom_call.1} parent=111 // pred_fallthru
          _
      $region112: #{tpu_custom_call.1} parent=5 // pred_fallthru
        _
    $region6: #{tpu_custom_call.1} parent=1 // loop_footer
      %s24 = sadd.s32 1, %s20
    $region7: #{tpu_custom_call.1} parent=1 // loop_footer_branch
      %19 = sbr.rel target = $region3
    $region8: #{tpu_custom_call.1} parent=1 // loop_exit
      _
    %863 = vsyncpa [#allocation9], 1
    %s864 = scalar_lea.sflag [#allocation9], 1
    %865 = vsyncpa %s864, 1

</llo_original>
